<compile_context>
chip_gen: v5e
topology: v5e:2x2
jax: 0.10.0
libtpu: 0.0.40
codegen_flags: <defaults>
</compile_context>

<pallas_src>
from functools import partial

import jax
import jax.numpy as jnp
from jax.experimental import pallas as pl
from jax.experimental.pallas import tpu as pltpu

EPS = 1e-5


def _softplus(x):
    # matches torch.nn.Softplus(beta=1, threshold=20)
    return jnp.where(x > 20.0, x, jnp.log1p(jnp.exp(jnp.minimum(x, 20.0))))


# ---------------------------------------------------------------------------
# Kernel: one GraphConvolution + BatchNorm1d(img_len) + residual + Softplus,
# computed for one tile of node rows.
# ---------------------------------------------------------------------------
def _gcn_bn_softplus_kernel(x_ref, h_ref, feat_ref, w_ref, g_ref, b_ref,
                            out_ref):
    # x_ref:    (B, N, C)   bf16   previous-layer activations (full, resident)
    # h_ref:    (B, TN, N)  bf16   row tile of the adjacency H
    # feat_ref: (B, TN, C)  bf16   residual tile (original `feature`)
    # w_ref:    (C, C)      bf16   GCN weight
    # g_ref:    (TN, 1)     f32    BN gamma (per node)
    # b_ref:    (TN, 1)     f32    BN beta  (per node)
    # out_ref:  (B, TN, C)
    B, TN, C = out_ref.shape

    x = x_ref[...]                       # bf16
    h = h_ref[...]                       # bf16
    w = w_ref[...]                       # bf16

    # gc = H @ (x @ W) == (H_tile @ x) @ W   (re-associated, tile-local)
    t = jnp.einsum('btn,bnc->btc', h, x,
                   preferred_element_type=jnp.float32)         # (B, TN, C) f32
    # Flatten batch+tile rows -> one big MXU matmul (cheap leading-dim merge).
    t2 = t.reshape(B * TN, C).astype(jnp.bfloat16)
    gc = jnp.dot(t2, w, preferred_element_type=jnp.float32)    # (B*TN, C) f32
    gc = gc.reshape(B, TN, C)

    # BatchNorm1d(img_len), training mode: stats per node over (batch, chan).
    # Single fused traversal: sum and sum-of-squares.
    n_stat = float(B * C)
    s1 = jnp.sum(gc, axis=(0, 2), keepdims=True)               # (1, TN, 1)
    s2 = jnp.sum(gc * gc, axis=(0, 2), keepdims=True)          # (1, TN, 1)
    mean = s1 / n_stat
    var = s2 / n_stat - mean * mean
    inv = jax.lax.rsqrt(var + EPS)

    gamma = g_ref[...][None, :, :]                             # (1, TN, 1)
    beta = b_ref[...][None, :, :]
    normed = (gc - mean) * inv * gamma + beta

    # Residual (always against the ORIGINAL feature) + Softplus, in f32.
    y = _softplus(feat_ref[...].astype(jnp.float32) + normed)
    out_ref[...] = y.astype(out_ref.dtype)


# ---------------------------------------------------------------------------
# Tiling / VMEM sizing helpers
# ---------------------------------------------------------------------------
def _tile_bytes(B, N, C, tile_n):
    bf, f32 = 2, 4
    return (B * N * C * bf            # x (full, resident)
            + B * tile_n * N * bf     # H row tile
            + B * tile_n * C * bf     # residual tile
            + C * C * bf              # W
            + 2 * tile_n * f32        # gamma + beta
            + B * tile_n * C * f32)   # output tile (worst case f32)


def _pick_tile_n(B, N, C, budget_bytes=16 << 20):
    """Largest node tile (multiple of 8, dividing N) whose double-buffered
    footprint fits a conservative VMEM budget (re-derive per generation)."""
    if N % 8 != 0:
        return N                      # fall back: one full-N block
    best = 8
    for t in range(8, N + 1, 8):
        if N % t != 0:
            continue
        if 2 * _tile_bytes(B, N, C, t) <= budget_bytes:
            best = t
    return best


# ---------------------------------------------------------------------------
# One GCN + BN + Softplus layer as a pallas_call tiled over nodes
# ---------------------------------------------------------------------------
def _gcn_bn_softplus(x, h, feat, w, gamma, beta, *, tile_n, out_dtype):
    B, N, C = x.shape
    n_tiles = N // tile_n
    vmem_limit = int(min(2 * _tile_bytes(B, N, C, tile_n) + (16 << 20),
                         48 << 20))

    grid_spec = pltpu.PrefetchScalarGridSpec(
        num_scalar_prefetch=0,
        grid=(n_tiles,),
        in_specs=[
            pl.BlockSpec((B, N, C), lambda i: (0, 0, 0)),        # x (resident)
            pl.BlockSpec((B, tile_n, N), lambda i: (0, i, 0)),   # H row tile
            pl.BlockSpec((B, tile_n, C), lambda i: (0, i, 0)),   # residual
            pl.BlockSpec((C, C), lambda i: (0, 0)),              # W
            pl.BlockSpec((tile_n, 1), lambda i: (i, 0)),         # gamma
            pl.BlockSpec((tile_n, 1), lambda i: (i, 0)),         # beta
        ],
        out_specs=pl.BlockSpec((B, tile_n, C), lambda i: (0, i, 0)),
    )
    return pl.pallas_call(
        _gcn_bn_softplus_kernel,
        out_shape=jax.ShapeDtypeStruct((B, N, C), out_dtype),
        grid_spec=grid_spec,
        compiler_params=pltpu.CompilerParams(
            dimension_semantics=("parallel",),   # shard node tiles across TCs
            vmem_limit_bytes=vmem_limit),
    )(x, h, feat, w, gamma, beta)


@partial(jax.jit, static_argnames=("tile_n",))
def hgcn_layer(feature, H, params, tile_n=None):
    """feature: (B, N, C) = (batch, img_len, in_c);  H: (B, N, N)."""
    B, N, C = feature.shape
    if tile_n is None:
        tile_n = _pick_tile_n(B, N, C)
    assert N % tile_n == 0 and (tile_n % 8 == 0 or tile_n == N), \
        "tile_n must divide N and be a multiple of 8 (or equal N)"

    # bf16 on the MXU data path; f32 accumulation inside the kernel.
    feat_bf = feature.astype(jnp.bfloat16)
    h_bf = H.astype(jnp.bfloat16)
    ws = [params['w1'].astype(jnp.bfloat16),
          params['w2'].astype(jnp.bfloat16),
          params['w3'].astype(jnp.bfloat16)]
    gs = [params['g1'].astype(jnp.float32),
          params['g2'].astype(jnp.float32),
          params['g3'].astype(jnp.float32)]
    bs = [params['b1'].astype(jnp.float32),
          params['b2'].astype(jnp.float32),
          params['b3'].astype(jnp.float32)]

    # NOTE: at toy shapes (~kFLOPs per layer) each call is overhead-dominated
    # on every TPU generation; the only real lever is batching more graphs
    # into B (they fold into the flattened (B*tileN, C) matmul M-dimension).
    x = feat_bf
    for li in range(3):
        out_dtype = jnp.float32 if li == 2 else jnp.bfloat16
        x = _gcn_bn_softplus(x, h_bf, feat_bf, ws[li], gs[li], bs[li],
                             tile_n=tile_n, out_dtype=out_dtype)
    return x


# ---------------------------------------------------------------------------
# References
# ---------------------------------------------------------------------------
def hgcn_layer_ref_f32(feature, H, params):
    """Pure-f32 reference of the PyTorch forward (training-mode BN)."""
    hp = jax.lax.Precision.HIGHEST
    f = feature.astype(jnp.float32)
    Hf = H.astype(jnp.float32)
    x = f
    for k in ('1', '2', '3'):
        w = params['w' + k].astype(jnp.float32)
        g = params['g' + k].astype(jnp.float32)
        b = params['b' + k].astype(jnp.float32)
        support = jnp.einsum('bnc,cd->bnd', x, w, precision=hp)
        gc = jnp.einsum('bnm,bmd->bnd', Hf, support, precision=hp)
        mean = jnp.mean(gc, axis=(0, 2), keepdims=True)
        var = jnp.mean((gc - mean) ** 2, axis=(0, 2), keepdims=True)
        normed = (gc - mean) / jnp.sqrt(var + EPS)
        normed = normed * g[None, :, :] + b[None, :, :]
        x = _softplus(f + normed)
    return x


def hgcn_layer_ref_bf16(feature, H, params):
    """Reference mirroring the kernel's bf16 data path (tight check)."""
    hp = jax.lax.Precision.HIGHEST
    bf = jnp.bfloat16
    f = feature.astype(bf).astype(jnp.float32)
    Hf = H.astype(bf).astype(jnp.float32)
    x = f
    for i, k in enumerate(('1', '2', '3')):
        w = params['w' + k].astype(bf).astype(jnp.float32)
        t = jnp.einsum('bnm,bmc->bnc', Hf, x, precision=hp)
        t = t.astype(bf).astype(jnp.float32)
        gc = jnp.einsum('bnc,cd->bnd', t, w, precision=hp)
        n_stat = gc.shape[0] * gc.shape[2]
        s1 = jnp.sum(gc, axis=(0, 2), keepdims=True)
        s2 = jnp.sum(gc * gc, axis=(0, 2), keepdims=True)
        mean = s1 / n_stat
        var = s2 / n_stat - mean * mean
        normed = (gc - mean) * jax.lax.rsqrt(var + EPS)
        normed = (normed * params['g' + k][None, :, :]
                  + params['b' + k][None, :, :])
        y = _softplus(f + normed)
        x = y.astype(bf).astype(jnp.float32) if i < 2 else y
    return x


def init_params(key, img_len, in_c):
    # xavier_normal_ (gain=1): std = sqrt(2 / (fan_in + fan_out))
    std = (2.0 / (in_c + in_c)) ** 0.5
    k1, k2, k3 = jax.random.split(key, 3)
    return {
        'w1': std * jax.random.normal(k1, (in_c, in_c), jnp.float32),
        'w2': std * jax.random.normal(k2, (in_c, in_c), jnp.float32),
        'w3': std * jax.random.normal(k3, (in_c, in_c), jnp.float32),
        # BatchNorm1d(img_len) affine params, stored (img_len, 1) so the
        # per-node broadcast needs no lane->sublane transpose in the kernel.
        'g1': jnp.ones((img_len, 1), jnp.float32),
        'b1': jnp.zeros((img_len, 1), jnp.float32),
        'g2': jnp.ones((img_len, 1), jnp.float32),
        'b2': jnp.zeros((img_len, 1), jnp.float32),
        'g3': jnp.ones((img_len, 1), jnp.float32),
        'b3': jnp.zeros((img_len, 1), jnp.float32),
    }


if __name__ == "__main__":
    B, N, C = 2, 128, 32          # batch, img_len (nodes), in_c (channels)
    key = jax.random.PRNGKey(0)
    k_feat, k_h, k_param = jax.random.split(key, 3)

    feature = jax.random.normal(k_feat, (B, N, C), jnp.float32)
    # simple symmetric, row-normalized adjacency
    A = jax.random.uniform(k_h, (B, N, N), jnp.float32)
    A = 0.5 * (A + jnp.swapaxes(A, 1, 2))
    H = A / jnp.sum(A, axis=-1, keepdims=True)

    params = init_params(k_param, N, C)
    # Perturb BN affine params slightly so the per-node broadcast path is
    # actually exercised (PyTorch default init is gamma=1, beta=0).
    pk = jax.random.split(jax.random.PRNGKey(1), 6)
    for idx, name in enumerate(('g1', 'g2', 'g3', 'b1', 'b2', 'b3')):
        params[name] = params[name] + 0.1 * jax.random.normal(
            pk[idx], params[name].shape, jnp.float32)

    # tile_n=32 -> 4-step node grid (exercises pipelining / megacore sharding)
    out = hgcn_layer(feature, H, params, tile_n=32)
    out = jax.block_until_ready(out)
    assert out.shape == (B, N, C)
    assert out.dtype == jnp.float32

    ref_bf = hgcn_layer_ref_bf16(feature, H, params)
    ref_f32 = hgcn_layer_ref_f32(feature, H, params)
    assert jnp.allclose(out, ref_bf, atol=2e-3, rtol=2e-3), \
        "mismatch vs bf16-emulating reference"
    assert jnp.allclose(out, ref_f32, atol=2e-1, rtol=2e-1), \
        "mismatch vs f32 reference"

    print("KERNEL_OK")
</pallas_src>

<mosaic_0001>
module attributes {stable_mosaic.version = 11 : i64} {
  func.func @_gcn_bn_softplus_kernel(%arg0: i32, %arg1: memref<2x128x32xbf16, #tpu.memory_space<vmem>>, %arg2: memref<2x32x128xbf16, #tpu.memory_space<vmem>>, %arg3: memref<2x32x32xbf16, #tpu.memory_space<vmem>>, %arg4: memref<32x32xbf16, #tpu.memory_space<vmem>>, %arg5: memref<32x1xf32, #tpu.memory_space<vmem>>, %arg6: memref<32x1xf32, #tpu.memory_space<vmem>>, %arg7: memref<2x32x32xbf16, #tpu.memory_space<vmem>>) attributes {dimension_semantics = [#tpu.dimension_semantics<parallel>], iteration_bounds = array<i64: 4>, scalar_prefetch = 0 : i64, scratch_operands = 0 : i64, tpu.core_type = #tpu.core_type<tc>, window_params = [{pipeline_mode = #tpu.pipeline_mode<synchronous>, transform_indices = @transform_0, window_bounds = array<i64: 2, 128, 32>}, {transform_indices = @transform_1, window_bounds = array<i64: 2, 32, 128>}, {transform_indices = @transform_2, window_bounds = array<i64: 2, 32, 32>}, {pipeline_mode = #tpu.pipeline_mode<synchronous>, transform_indices = @transform_3, window_bounds = array<i64: 32, 32>}, {transform_indices = @transform_4, window_bounds = array<i64: 32, 1>}, {transform_indices = @transform_5, window_bounds = array<i64: 32, 1>}, {transform_indices = @transform_6, window_bounds = array<i64: 2, 32, 32>}]} {
    %c0 = arith.constant 0 : index
    %c0_0 = arith.constant 0 : index
    %c0_1 = arith.constant 0 : index
    %0 = vector.load %arg1[%c0, %c0_0, %c0_1] : memref<2x128x32xbf16, #tpu.memory_space<vmem>>, vector<2x128x32xbf16>
    %c0_2 = arith.constant 0 : index
    %c0_3 = arith.constant 0 : index
    %c0_4 = arith.constant 0 : index
    %1 = vector.load %arg2[%c0_2, %c0_3, %c0_4] : memref<2x32x128xbf16, #tpu.memory_space<vmem>>, vector<2x32x128xbf16>
    %c0_5 = arith.constant 0 : index
    %c0_6 = arith.constant 0 : index
    %2 = vector.load %arg4[%c0_5, %c0_6] : memref<32x32xbf16, #tpu.memory_space<vmem>>, vector<32x32xbf16>
    "tpu.trace_start"() <{level = 10 : i32, message = "btn,bnc->btc"}> : () -> ()
    %cst = arith.constant dense<0.000000e+00> : vector<2x32x32xf32>
    %3 = tpu.matmul %1, %0, %cst {dimension_numbers = #tpu.dot_dimension_numbers<[2], [1], [1], [2], [0, 0, 0, 1, 1, 2], [0], [0]>} : vector<2x32x128xbf16>, vector<2x128x32xbf16>, vector<2x32x32xf32> -> vector<2x32x32xf32>
    "tpu.trace_stop"() : () -> ()
    %4 = vector.shape_cast %3 : vector<2x32x32xf32> to vector<64x32xf32>
    %5 = arith.truncf %4 : vector<64x32xf32> to vector<64x32xbf16>
    %cst_7 = arith.constant dense<0.000000e+00> : vector<64x32xf32>
    %6 = tpu.matmul %5, %2, %cst_7 {dimension_numbers = #tpu.dot_dimension_numbers<[1], [0], [0], [1], [0, 0, 1, 1], [], []>} : vector<64x32xbf16>, vector<32x32xbf16>, vector<64x32xf32> -> vector<64x32xf32>
    %7 = vector.shape_cast %6 : vector<64x32xf32> to vector<2x32x32xf32>
    %cst_8 = arith.constant dense<0.000000e+00> : vector<32xf32>
    %8 = vector.multi_reduction <add>, %7, %cst_8 [0, 2] : vector<2x32x32xf32> to vector<32xf32>
    %9 = vector.shape_cast %8 : vector<32xf32> to vector<1x32x1xf32>
    %10 = arith.mulf %7, %7 : vector<2x32x32xf32>
    %cst_9 = arith.constant dense<0.000000e+00> : vector<32xf32>
    %11 = vector.multi_reduction <add>, %10, %cst_9 [0, 2] : vector<2x32x32xf32> to vector<32xf32>
    %12 = vector.shape_cast %11 : vector<32xf32> to vector<1x32x1xf32>
    %cst_10 = arith.constant 6.400000e+01 : f32
    %13 = vector.broadcast %cst_10 : f32 to vector<1x32x1xf32>
    %14 = arith.divf %9, %13 : vector<1x32x1xf32>
    %cst_11 = arith.constant 6.400000e+01 : f32
    %15 = vector.broadcast %cst_11 : f32 to vector<1x32x1xf32>
    %16 = arith.divf %12, %15 : vector<1x32x1xf32>
    %17 = arith.mulf %14, %14 : vector<1x32x1xf32>
    %18 = arith.subf %16, %17 : vector<1x32x1xf32>
    %cst_12 = arith.constant 9.99999974E-6 : f32
    %19 = vector.broadcast %cst_12 : f32 to vector<1x32x1xf32>
    %20 = arith.addf %18, %19 : vector<1x32x1xf32>
    %21 = math.rsqrt %20 : vector<1x32x1xf32>
    %c0_13 = arith.constant 0 : index
    %c0_14 = arith.constant 0 : index
    %22 = vector.load %arg5[%c0_13, %c0_14] : memref<32x1xf32, #tpu.memory_space<vmem>>, vector<32x1xf32>
    %23 = vector.shape_cast %22 : vector<32x1xf32> to vector<1x32x1xf32>
    %c0_15 = arith.constant 0 : index
    %c0_16 = arith.constant 0 : index
    %24 = vector.load %arg6[%c0_15, %c0_16] : memref<32x1xf32, #tpu.memory_space<vmem>>, vector<32x1xf32>
    %25 = vector.shape_cast %24 : vector<32x1xf32> to vector<1x32x1xf32>
    %26 = vector.broadcast %14 : vector<1x32x1xf32> to vector<2x32x32xf32>
    %27 = arith.subf %7, %26 : vector<2x32x32xf32>
    %28 = vector.broadcast %21 : vector<1x32x1xf32> to vector<2x32x32xf32>
    %29 = arith.mulf %27, %28 : vector<2x32x32xf32>
    %30 = vector.broadcast %23 : vector<1x32x1xf32> to vector<2x32x32xf32>
    %31 = arith.mulf %29, %30 : vector<2x32x32xf32>
    %32 = vector.broadcast %25 : vector<1x32x1xf32> to vector<2x32x32xf32>
    %33 = arith.addf %31, %32 : vector<2x32x32xf32>
    %c0_17 = arith.constant 0 : index
    %c0_18 = arith.constant 0 : index
    %c0_19 = arith.constant 0 : index
    %34 = vector.load %arg3[%c0_17, %c0_18, %c0_19] : memref<2x32x32xbf16, #tpu.memory_space<vmem>>, vector<2x32x32xbf16>
    %35 = arith.extf %34 : vector<2x32x32xbf16> to vector<2x32x32xf32>
    %36 = arith.addf %35, %33 : vector<2x32x32xf32>
    %cst_20 = arith.constant 2.000000e+01 : f32
    %37 = vector.broadcast %cst_20 : f32 to vector<2x32x32xf32>
    %38 = arith.cmpf ogt, %36, %37 : vector<2x32x32xf32>
    %cst_21 = arith.constant 2.000000e+01 : f32
    %39 = vector.broadcast %cst_21 : f32 to vector<2x32x32xf32>
    %40 = arith.minimumf %36, %39 : vector<2x32x32xf32>
    %41 = math.exp %40 : vector<2x32x32xf32>
    %42 = math.log1p %41 : vector<2x32x32xf32>
    %43 = arith.select %38, %36, %42 : vector<2x32x32xi1>, vector<2x32x32xf32>
    %44 = arith.truncf %43 : vector<2x32x32xf32> to vector<2x32x32xbf16>
    %c0_22 = arith.constant 0 : index
    %c0_23 = arith.constant 0 : index
    %c0_24 = arith.constant 0 : index
    %45 = vector.load %arg7[%c0_22, %c0_23, %c0_24] : memref<2x32x32xbf16, #tpu.memory_space<vmem>>, vector<2x32x32xbf16>
    tpu.vector_store %arg7[%c0_22, %c0_23, %c0_24], %44 {strides = array<i32>} : memref<2x32x32xbf16, #tpu.memory_space<vmem>>, vector<2x32x32xbf16>,
    return
  }
  func.func @transform_0(%arg0: i32) -> (i32, i32, i32) {
    %c0_i32 = arith.constant 0 : i32
    %c0_i32_0 = arith.constant 0 : i32
    %c0_i32_1 = arith.constant 0 : i32
    %c0_i32_2 = arith.constant 0 : i32
    return %c0_i32, %c0_i32_0, %c0_i32_1 : i32, i32, i32
  }
  func.func @transform_1(%arg0: i32) -> (i32, i32, i32) {
    %c0_i32 = arith.constant 0 : i32
    %c0_i32_0 = arith.constant 0 : i32
    %c0_i32_1 = arith.constant 0 : i32
    return %c0_i32, %arg0, %c0_i32_0 : i32, i32, i32
  }
  func.func @transform_2(%arg0: i32) -> (i32, i32, i32) {
    %c0_i32 = arith.constant 0 : i32
    %c0_i32_0 = arith.constant 0 : i32
    %c0_i32_1 = arith.constant 0 : i32
    return %c0_i32, %arg0, %c0_i32_0 : i32, i32, i32
  }
  func.func @transform_3(%arg0: i32) -> (i32, i32) {
    %c0_i32 = arith.constant 0 : i32
    %c0_i32_0 = arith.constant 0 : i32
    %c0_i32_1 = arith.constant 0 : i32
    return %c0_i32, %c0_i32_0 : i32, i32
  }
  func.func @transform_4(%arg0: i32) -> (i32, i32) {
    %c0_i32 = arith.constant 0 : i32
    %c0_i32_0 = arith.constant 0 : i32
    return %arg0, %c0_i32 : i32, i32
  }
  func.func @transform_5(%arg0: i32) -> (i32, i32) {
    %c0_i32 = arith.constant 0 : i32
    %c0_i32_0 = arith.constant 0 : i32
    return %arg0, %c0_i32 : i32, i32
  }
  func.func @transform_6(%arg0: i32) -> (i32, i32, i32) {
    %c0_i32 = arith.constant 0 : i32
    %c0_i32_0 = arith.constant 0 : i32
    %c0_i32_1 = arith.constant 0 : i32
    return %c0_i32, %arg0, %c0_i32_0 : i32, i32, i32
  }
}

module attributes {stable_mosaic.version = 11 : i64} {
  func.func @_gcn_bn_softplus_kernel(%arg0: i32, %arg1: memref<2x128x32xbf16, #tpu.memory_space<vmem>>, %arg2: memref<2x32x128xbf16, #tpu.memory_space<vmem>>, %arg3: memref<2x32x32xbf16, #tpu.memory_space<vmem>>, %arg4: memref<32x32xbf16, #tpu.memory_space<vmem>>, %arg5: memref<32x1xf32, #tpu.memory_space<vmem>>, %arg6: memref<32x1xf32, #tpu.memory_space<vmem>>, %arg7: memref<2x32x32xf32, #tpu.memory_space<vmem>>) attributes {dimension_semantics = [#tpu.dimension_semantics<parallel>], iteration_bounds = array<i64: 4>, scalar_prefetch = 0 : i64, scratch_operands = 0 : i64, tpu.core_type = #tpu.core_type<tc>, window_params = [{pipeline_mode = #tpu.pipeline_mode<synchronous>, transform_indices = @transform_0, window_bounds = array<i64: 2, 128, 32>}, {transform_indices = @transform_1, window_bounds = array<i64: 2, 32, 128>}, {transform_indices = @transform_2, window_bounds = array<i64: 2, 32, 32>}, {pipeline_mode = #tpu.pipeline_mode<synchronous>, transform_indices = @transform_3, window_bounds = array<i64: 32, 32>}, {transform_indices = @transform_4, window_bounds = array<i64: 32, 1>}, {transform_indices = @transform_5, window_bounds = array<i64: 32, 1>}, {transform_indices = @transform_6, window_bounds = array<i64: 2, 32, 32>}]} {
    %c0 = arith.constant 0 : index
    %c0_0 = arith.constant 0 : index
    %c0_1 = arith.constant 0 : index
    %0 = vector.load %arg1[%c0, %c0_0, %c0_1] : memref<2x128x32xbf16, #tpu.memory_space<vmem>>, vector<2x128x32xbf16>
    %c0_2 = arith.constant 0 : index
    %c0_3 = arith.constant 0 : index
    %c0_4 = arith.constant 0 : index
    %1 = vector.load %arg2[%c0_2, %c0_3, %c0_4] : memref<2x32x128xbf16, #tpu.memory_space<vmem>>, vector<2x32x128xbf16>
    %c0_5 = arith.constant 0 : index
    %c0_6 = arith.constant 0 : index
    %2 = vector.load %arg4[%c0_5, %c0_6] : memref<32x32xbf16, #tpu.memory_space<vmem>>, vector<32x32xbf16>
    "tpu.trace_start"() <{level = 10 : i32, message = "btn,bnc->btc"}> : () -> ()
    %cst = arith.constant dense<0.000000e+00> : vector<2x32x32xf32>
    %3 = tpu.matmul %1, %0, %cst {dimension_numbers = #tpu.dot_dimension_numbers<[2], [1], [1], [2], [0, 0, 0, 1, 1, 2], [0], [0]>} : vector<2x32x128xbf16>, vector<2x128x32xbf16>, vector<2x32x32xf32> -> vector<2x32x32xf32>
    "tpu.trace_stop"() : () -> ()
    %4 = vector.shape_cast %3 : vector<2x32x32xf32> to vector<64x32xf32>
    %5 = arith.truncf %4 : vector<64x32xf32> to vector<64x32xbf16>
    %cst_7 = arith.constant dense<0.000000e+00> : vector<64x32xf32>
    %6 = tpu.matmul %5, %2, %cst_7 {dimension_numbers = #tpu.dot_dimension_numbers<[1], [0], [0], [1], [0, 0, 1, 1], [], []>} : vector<64x32xbf16>, vector<32x32xbf16>, vector<64x32xf32> -> vector<64x32xf32>
    %7 = vector.shape_cast %6 : vector<64x32xf32> to vector<2x32x32xf32>
    %cst_8 = arith.constant dense<0.000000e+00> : vector<32xf32>
    %8 = vector.multi_reduction <add>, %7, %cst_8 [0, 2] : vector<2x32x32xf32> to vector<32xf32>
    %9 = vector.shape_cast %8 : vector<32xf32> to vector<1x32x1xf32>
    %10 = arith.mulf %7, %7 : vector<2x32x32xf32>
    %cst_9 = arith.constant dense<0.000000e+00> : vector<32xf32>
    %11 = vector.multi_reduction <add>, %10, %cst_9 [0, 2] : vector<2x32x32xf32> to vector<32xf32>
    %12 = vector.shape_cast %11 : vector<32xf32> to vector<1x32x1xf32>
    %cst_10 = arith.constant 6.400000e+01 : f32
    %13 = vector.broadcast %cst_10 : f32 to vector<1x32x1xf32>
    %14 = arith.divf %9, %13 : vector<1x32x1xf32>
    %cst_11 = arith.constant 6.400000e+01 : f32
    %15 = vector.broadcast %cst_11 : f32 to vector<1x32x1xf32>
    %16 = arith.divf %12, %15 : vector<1x32x1xf32>
    %17 = arith.mulf %14, %14 : vector<1x32x1xf32>
    %18 = arith.subf %16, %17 : vector<1x32x1xf32>
    %cst_12 = arith.constant 9.99999974E-6 : f32
    %19 = vector.broadcast %cst_12 : f32 to vector<1x32x1xf32>
    %20 = arith.addf %18, %19 : vector<1x32x1xf32>
    %21 = math.rsqrt %20 : vector<1x32x1xf32>
    %c0_13 = arith.constant 0 : index
    %c0_14 = arith.constant 0 : index
    %22 = vector.load %arg5[%c0_13, %c0_14] : memref<32x1xf32, #tpu.memory_space<vmem>>, vector<32x1xf32>
    %23 = vector.shape_cast %22 : vector<32x1xf32> to vector<1x32x1xf32>
    %c0_15 = arith.constant 0 : index
    %c0_16 = arith.constant 0 : index
    %24 = vector.load %arg6[%c0_15, %c0_16] : memref<32x1xf32, #tpu.memory_space<vmem>>, vector<32x1xf32>
    %25 = vector.shape_cast %24 : vector<32x1xf32> to vector<1x32x1xf32>
    %26 = vector.broadcast %14 : vector<1x32x1xf32> to vector<2x32x32xf32>
    %27 = arith.subf %7, %26 : vector<2x32x32xf32>
    %28 = vector.broadcast %21 : vector<1x32x1xf32> to vector<2x32x32xf32>
    %29 = arith.mulf %27, %28 : vector<2x32x32xf32>
    %30 = vector.broadcast %23 : vector<1x32x1xf32> to vector<2x32x32xf32>
    %31 = arith.mulf %29, %30 : vector<2x32x32xf32>
    %32 = vector.broadcast %25 : vector<1x32x1xf32> to vector<2x32x32xf32>
    %33 = arith.addf %31, %32 : vector<2x32x32xf32>
    %c0_17 = arith.constant 0 : index
    %c0_18 = arith.constant 0 : index
    %c0_19 = arith.constant 0 : index
    %34 = vector.load %arg3[%c0_17, %c0_18, %c0_19] : memref<2x32x32xbf16, #tpu.memory_space<vmem>>, vector<2x32x32xbf16>
    %35 = arith.extf %34 : vector<2x32x32xbf16> to vector<2x32x32xf32>
    %36 = arith.addf %35, %33 : vector<2x32x32xf32>
    %cst_20 = arith.constant 2.000000e+01 : f32
    %37 = vector.broadcast %cst_20 : f32 to vector<2x32x32xf32>
    %38 = arith.cmpf ogt, %36, %37 : vector<2x32x32xf32>
    %cst_21 = arith.constant 2.000000e+01 : f32
    %39 = vector.broadcast %cst_21 : f32 to vector<2x32x32xf32>
    %40 = arith.minimumf %36, %39 : vector<2x32x32xf32>
    %41 = math.exp %40 : vector<2x32x32xf32>
    %42 = math.log1p %41 : vector<2x32x32xf32>
    %43 = arith.select %38, %36, %42 : vector<2x32x32xi1>, vector<2x32x32xf32>
    %c0_22 = arith.constant 0 : index
    %c0_23 = arith.constant 0 : index
    %c0_24 = arith.constant 0 : index
    %44 = vector.load %arg7[%c0_22, %c0_23, %c0_24] : memref<2x32x32xf32, #tpu.memory_space<vmem>>, vector<2x32x32xf32>
    tpu.vector_store %arg7[%c0_22, %c0_23, %c0_24], %43 {strides = array<i32>} : memref<2x32x32xf32, #tpu.memory_space<vmem>>, vector<2x32x32xf32>,
    return
  }
  func.func @transform_0(%arg0: i32) -> (i32, i32, i32) {
    %c0_i32 = arith.constant 0 : i32
    %c0_i32_0 = arith.constant 0 : i32
    %c0_i32_1 = arith.constant 0 : i32
    %c0_i32_2 = arith.constant 0 : i32
    return %c0_i32, %c0_i32_0, %c0_i32_1 : i32, i32, i32
  }
  func.func @transform_1(%arg0: i32) -> (i32, i32, i32) {
    %c0_i32 = arith.constant 0 : i32
    %c0_i32_0 = arith.constant 0 : i32
    %c0_i32_1 = arith.constant 0 : i32
    return %c0_i32, %arg0, %c0_i32_0 : i32, i32, i32
  }
  func.func @transform_2(%arg0: i32) -> (i32, i32, i32) {
    %c0_i32 = arith.constant 0 : i32
    %c0_i32_0 = arith.constant 0 : i32
    %c0_i32_1 = arith.constant 0 : i32
    return %c0_i32, %arg0, %c0_i32_0 : i32, i32, i32
  }
  func.func @transform_3(%arg0: i32) -> (i32, i32) {
    %c0_i32 = arith.constant 0 : i32
    %c0_i32_0 = arith.constant 0 : i32
    %c0_i32_1 = arith.constant 0 : i32
    return %c0_i32, %c0_i32_0 : i32, i32
  }
  func.func @transform_4(%arg0: i32) -> (i32, i32) {
    %c0_i32 = arith.constant 0 : i32
    %c0_i32_0 = arith.constant 0 : i32
    return %arg0, %c0_i32 : i32, i32
  }
  func.func @transform_5(%arg0: i32) -> (i32, i32) {
    %c0_i32 = arith.constant 0 : i32
    %c0_i32_0 = arith.constant 0 : i32
    return %arg0, %c0_i32 : i32, i32
  }
  func.func @transform_6(%arg0: i32) -> (i32, i32, i32) {
    %c0_i32 = arith.constant 0 : i32
    %c0_i32_0 = arith.constant 0 : i32
    %c0_i32_1 = arith.constant 0 : i32
    return %c0_i32, %arg0, %c0_i32_0 : i32, i32, i32
  }
}

</mosaic_0001>

<llo_original>
// kernel: hgcn_layer.5
$region0: #{hgcn_layer.5}
  #allocation0 [shape = 'u32[]', space=smem, size = 0x4, offset = 0x4, fixed_abs, tag = 'smem constant byte address 0x4 - core index']
  #allocation1 [shape = 'u32[72,128]{1,0:T(1,128)}', space=vmem, size = 0x9000, scoped, tag = 'internal scratch']
  %s0 = inlined_call_operand.vmem [shape: bf16[2,128,32], index: 0, kind: input, shape index: {}]
  %s1 = inlined_call_operand.vmem [shape: bf16[2,128,128], index: 1, kind: input, shape index: {}]
  %s2 = inlined_call_operand.vmem [shape: bf16[2,128,32], index: 2, kind: input, shape index: {}]
  %s3 = inlined_call_operand.vmem [shape: bf16[32,32], index: 3, kind: input, shape index: {}]
  %s4 = inlined_call_operand.vmem [shape: f32[128,1], index: 4, kind: input, shape index: {}]
  %s5 = inlined_call_operand.vmem [shape: f32[128,1], index: 5, kind: input, shape index: {}]
  %s6 = inlined_call_operand.vmem [shape: f32[2,128,32], index: 6, kind: output, shape index: {}]
  %s7 = sld [smem:[#allocation0]]
  $region173: #{hgcn_layer.5} parent=0
    _
  %s9 = ssub.s32 1, %s7
  %s10 = scalar_select 0, %s9, %s7
  $region1: #{hgcn_layer.5} parent=0
    #allocation2 [shape = 'u8[32768]{0}', space=vmem, size = 0x8000, scoped, tag = 'input window, operand 1']
    #allocation3 [shape = 'u8[32768]{0}', space=vmem, size = 0x8000, scoped, tag = 'input window, operand 2']
    #allocation4 [shape = 'u8[65536]{0}', space=vmem, size = 0x10000, scoped, tag = 'output window, operand 0']
    loop: start=0, step=1, limit=6
    $region2: #{hgcn_layer.5} parent=1 // loop_pre_header
      _
    $region3: #{hgcn_layer.5} parent=1 // loop_header
      %s12 = sphi 0, %s16
      %p13 = scmp.ge.s32.totalorder %s12, 6
      %s20 = sphi 0, %s20
      %s22 = sphi 0, %s20
      %s23 = sphi 0, %s22
      %s37 = sphi 0, %s23
      %s43 = sphi 0, %s45
      %s46 = sphi 0, %s43
      %s47 = sphi 0, %s46
      %s63 = sphi 0, %s47
      %s69 = sphi 0, %s71
      %s72 = sphi 0, %s69
      %s73 = sphi 0, %s72
      %s89 = sphi 0, %s73
      %s93 = sphi 0, %s93
      %s95 = sphi 0, %s93
      %s96 = sphi 0, %s95
      %s110 = sphi 0, %s96
      %s116 = sphi 0, %s118
      %s119 = sphi 0, %s116
      %s120 = sphi 0, %s119
      %s136 = sphi 0, %s120
      %s142 = sphi 0, %s144
      %s145 = sphi 0, %s142
      %s146 = sphi 0, %s145
      %s162 = sphi 0, %s146
      %s168 = sphi 0, %s170
      %s171 = sphi 0, %s168
      %s172 = sphi 0, %s171
      %s188 = sphi 0, %s172
    $region4: #{hgcn_layer.5} parent=1 // loop_header_branch
      %15 = sbr.rel (%p13) target = $region8
    $region5: #{hgcn_layer.5} parent=1 // loop_body
      %s17 = ssub.s32 %s12, 1
      %s18 = ssub.s32 %s12, 2
      %s19 = sadd.s32 %s12, 1
      %s21 = sadd.s32 %s20, 1
      %p24 = scmp.eq.s32.totalorder %s12, 3
      %p25 = scmp.ne.s32.totalorder %s20, %s22
      %p26 = scmp.eq.s32.totalorder %s12, 0
      %p27 = por %p25, %p26
      %p28 = scmp.ne.s32.totalorder %s20, %s22
      %p29 = scmp.eq.s32.totalorder %s17, 3
      %p30 = por %p28, %p29
      %p31 = scmp.ne.s32.totalorder %s22, %s23
      %p32 = scmp.eq.s32.totalorder %s17, 0
      %p33 = por %p31, %p32
      %p34 = scmp.ne.s32.totalorder %s22, %s23
      %p35 = scmp.eq.s32.totalorder %s18, 3
      %p36 = por %p34, %p35
      %p38 = scmp.ne.s32.totalorder %s23, %s37
      %p39 = scmp.eq.s32.totalorder %s18, 0
      %p40 = por %p38, %p39
      %s41 = ssub.s32 %s12, %s19
      %p42 = scmp.eq.s32.totalorder %s41, 0
      %s44 = sadd.s32 %s43, 1
      %s45 = scalar_select %p42, %s43, %s44
      %p48 = pneg %p42
      %p49 = scmp.eq.s32.totalorder %s12, 3
      %p50 = por %p48, %p49
      %p51 = scmp.ne.s32.totalorder %s43, %s46
      %p52 = scmp.eq.s32.totalorder %s12, 0
      %p53 = por %p51, %p52
      %p54 = scmp.ne.s32.totalorder %s43, %s46
      %p55 = scmp.eq.s32.totalorder %s17, 3
      %p56 = por %p54, %p55
      %p57 = scmp.ne.s32.totalorder %s46, %s47
      %p58 = scmp.eq.s32.totalorder %s17, 0
      %p59 = por %p57, %p58
      %p60 = scmp.ne.s32.totalorder %s46, %s47
      %p61 = scmp.eq.s32.totalorder %s18, 3
      %p62 = por %p60, %p61
      %p64 = scmp.ne.s32.totalorder %s47, %s63
      %p65 = scmp.eq.s32.totalorder %s18, 0
      %p66 = por %p64, %p65
      %s67 = ssub.s32 %s12, %s19
      %p68 = scmp.eq.s32.totalorder %s67, 0
      %s70 = sadd.s32 %s69, 1
      %s71 = scalar_select %p68, %s69, %s70
      %p74 = pneg %p68
      %p75 = scmp.eq.s32.totalorder %s12, 3
      %p76 = por %p74, %p75
      %p77 = scmp.ne.s32.totalorder %s69, %s72
      %p78 = scmp.eq.s32.totalorder %s12, 0
      %p79 = por %p77, %p78
      %p80 = scmp.ne.s32.totalorder %s69, %s72
      %p81 = scmp.eq.s32.totalorder %s17, 3
      %p82 = por %p80, %p81
      %p83 = scmp.ne.s32.totalorder %s72, %s73
      %p84 = scmp.eq.s32.totalorder %s17, 0
      %p85 = por %p83, %p84
      %p86 = scmp.ne.s32.totalorder %s72, %s73
      %p87 = scmp.eq.s32.totalorder %s18, 3
      %p88 = por %p86, %p87
      %p90 = scmp.ne.s32.totalorder %s73, %s89
      %p91 = scmp.eq.s32.totalorder %s18, 0
      %p92 = por %p90, %p91
      %s94 = sadd.s32 %s93, 1
      %p97 = scmp.eq.s32.totalorder %s12, 3
      %p98 = scmp.ne.s32.totalorder %s93, %s95
      %p99 = scmp.eq.s32.totalorder %s12, 0
      %p100 = por %p98, %p99
      %p101 = scmp.ne.s32.totalorder %s93, %s95
      %p102 = scmp.eq.s32.totalorder %s17, 3
      %p103 = por %p101, %p102
      %p104 = scmp.ne.s32.totalorder %s95, %s96
      %p105 = scmp.eq.s32.totalorder %s17, 0
      %p106 = por %p104, %p105
      %p107 = scmp.ne.s32.totalorder %s95, %s96
      %p108 = scmp.eq.s32.totalorder %s18, 3
      %p109 = por %p107, %p108
      %p111 = scmp.ne.s32.totalorder %s96, %s110
      %p112 = scmp.eq.s32.totalorder %s18, 0
      %p113 = por %p111, %p112
      %s114 = ssub.s32 %s12, %s19
      %p115 = scmp.eq.s32.totalorder %s114, 0
      %s117 = sadd.s32 %s116, 1
      %s118 = scalar_select %p115, %s116, %s117
      %p121 = pneg %p115
      %p122 = scmp.eq.s32.totalorder %s12, 3
      %p123 = por %p121, %p122
      %p124 = scmp.ne.s32.totalorder %s116, %s119
      %p125 = scmp.eq.s32.totalorder %s12, 0
      %p126 = por %p124, %p125
      %p127 = scmp.ne.s32.totalorder %s116, %s119
      %p128 = scmp.eq.s32.totalorder %s17, 3
      %p129 = por %p127, %p128
      %p130 = scmp.ne.s32.totalorder %s119, %s120
      %p131 = scmp.eq.s32.totalorder %s17, 0
      %p132 = por %p130, %p131
      %p133 = scmp.ne.s32.totalorder %s119, %s120
      %p134 = scmp.eq.s32.totalorder %s18, 3
      %p135 = por %p133, %p134
      %p137 = scmp.ne.s32.totalorder %s120, %s136
      %p138 = scmp.eq.s32.totalorder %s18, 0
      %p139 = por %p137, %p138
      %s140 = ssub.s32 %s12, %s19
      %p141 = scmp.eq.s32.totalorder %s140, 0
      %s143 = sadd.s32 %s142, 1
      %s144 = scalar_select %p141, %s142, %s143
      %p147 = pneg %p141
      %p148 = scmp.eq.s32.totalorder %s12, 3
      %p149 = por %p147, %p148
      %p150 = scmp.ne.s32.totalorder %s142, %s145
      %p151 = scmp.eq.s32.totalorder %s12, 0
      %p152 = por %p150, %p151
      %p153 = scmp.ne.s32.totalorder %s142, %s145
      %p154 = scmp.eq.s32.totalorder %s17, 3
      %p155 = por %p153, %p154
      %p156 = scmp.ne.s32.totalorder %s145, %s146
      %p157 = scmp.eq.s32.totalorder %s17, 0
      %p158 = por %p156, %p157
      %p159 = scmp.ne.s32.totalorder %s145, %s146
      %p160 = scmp.eq.s32.totalorder %s18, 3
      %p161 = por %p159, %p160
      %p163 = scmp.ne.s32.totalorder %s146, %s162
      %p164 = scmp.eq.s32.totalorder %s18, 0
      %p165 = por %p163, %p164
      %s166 = ssub.s32 %s12, %s19
      %p167 = scmp.eq.s32.totalorder %s166, 0
      %s169 = sadd.s32 %s168, 1
      %s170 = scalar_select %p167, %s168, %s169
      %p173 = pneg %p167
      %p174 = scmp.eq.s32.totalorder %s12, 3
      %p175 = por %p173, %p174
      %p176 = scmp.ne.s32.totalorder %s168, %s171
      %p177 = scmp.eq.s32.totalorder %s12, 0
      %p178 = por %p176, %p177
      %p179 = scmp.ne.s32.totalorder %s168, %s171
      %p180 = scmp.eq.s32.totalorder %s17, 3
      %p181 = por %p179, %p180
      %p182 = scmp.ne.s32.totalorder %s171, %s172
      %p183 = scmp.eq.s32.totalorder %s17, 0
      %p184 = por %p182, %p183
      %p185 = scmp.ne.s32.totalorder %s171, %s172
      %p186 = scmp.eq.s32.totalorder %s18, 3
      %p187 = por %p185, %p186
      %p189 = scmp.ne.s32.totalorder %s172, %s188
      %p190 = scmp.eq.s32.totalorder %s18, 0
      %p191 = por %p189, %p190
      %p192 = scmp.le.s32.totalorder 1, %s12
      %p193 = scmp.lt.s32.totalorder %s12, 5
      %p194 = pnand %p192, %p193
      %p195 = pneg %p194
      // Predicated region
      $region9: #{hgcn_layer.5} parent=5 // pred_check
        _
      $region10: #{hgcn_layer.5} parent=5 // pred_check_branch
        %197 = sbr.rel (%p194) target = $region12
      $region11: #{hgcn_layer.5} parent=5 // pred_region
        %s198 = ssub.s32 %s12, 1
        // Predicated region
        $region13: #{hgcn_layer.5} parent=11 // pred_check
          %p199 = pneg %p33
        $region14: #{hgcn_layer.5} parent=11 // pred_check_branch
          %201 = sbr.rel (%p199) target = $region16
        $region15: #{hgcn_layer.5} parent=11 // pred_region
          _
        $region16: #{hgcn_layer.5} parent=11 // pred_fallthru
          _
        // Predicated region
        $region17: #{hgcn_layer.5} parent=11 // pred_check
          %p202 = pneg %p106
        $region18: #{hgcn_layer.5} parent=11 // pred_check_branch
          %204 = sbr.rel (%p202) target = $region20
        $region19: #{hgcn_layer.5} parent=11 // pred_region
          _
        $region20: #{hgcn_layer.5} parent=11 // pred_fallthru
          _
      $region12: #{hgcn_layer.5} parent=5 // pred_fallthru
        _
      %p205 = scmp.lt.s32.totalorder %s12, 4
      // Predicated region
      $region21: #{hgcn_layer.5} parent=5 // pred_check
        %p206 = pneg %p205
      $region22: #{hgcn_layer.5} parent=5 // pred_check_branch
        %208 = sbr.rel (%p206) target = $region24
      $region23: #{hgcn_layer.5} parent=5 // pred_region
        // Predicated region
        $region25: #{hgcn_layer.5} parent=23 // pred_check
          %p209 = pneg %p53
        $region26: #{hgcn_layer.5} parent=23 // pred_check_branch
          %211 = sbr.rel (%p209) target = $region28
        $region27: #{hgcn_layer.5} parent=23 // pred_region
          %s212 = sand.u32 %s43, 1
          %s213 = sand.u32 %s43, 1
          %s214 = smul.addr %s213, 32
          %s215 = scalar_lea.vmem [#allocation2], %s214
          %s216 = smul.u32 4, %s12
          %s217 = smul.addr %s216, 4
          %s218 = scalar_lea.vmem %s1, %s217
          // Predicated region
          $region29: #{hgcn_layer.5} parent=27 // pred_check
            _
          $region30: #{hgcn_layer.5} parent=27 // pred_check_branch
            %220 = sbr.rel (0) target = $region32
          $region31: #{hgcn_layer.5} parent=27 // pred_region
            // Predicated region
            $region33: #{hgcn_layer.5} parent=31 // pred_check
              _
            $region34: #{hgcn_layer.5} parent=31 // pred_check_branch
              %222 = sbr.rel target = $region36
            $region35: #{hgcn_layer.5} parent=31 // pred_region
              // Predicated region
              $region48: #{hgcn_layer.5} parent=35 // pred_check
                _
              $region49: #{hgcn_layer.5} parent=35 // pred_check_branch
                %252 = sbr.rel (0) target = $region51
              $region50: #{hgcn_layer.5} parent=35 // pred_region
                loop: start=0, step=1, limit=1
                $region52: #{hgcn_layer.5} parent=50 // loop_pre_header
                  _
                $region53: #{hgcn_layer.5} parent=50 // loop_header
                  %s254 = sphi 0, %s258
                  %p255 = scmp.ge.s32.totalorder %s254, 1
                  %s259 = sphi %s218, %s218
                  %s260 = sphi %s215, %s215
                $region54: #{hgcn_layer.5} parent=50 // loop_header_branch
                  %257 = sbr.rel (%p255) target = $region58
                $region55: #{hgcn_layer.5} parent=50 // loop_body
                  _
                $region56: #{hgcn_layer.5} parent=50 // loop_footer
                  %s258 = sadd.s32 1, %s254
                $region57: #{hgcn_layer.5} parent=50 // loop_footer_branch
                  %253 = sbr.rel target = $region53
                $region58: #{hgcn_layer.5} parent=50 // loop_exit
                  _
                %s262 = ssub.s32 16, 1
                loop: start=0, step=1, limit=1
                $region59: #{hgcn_layer.5} parent=50 // loop_pre_header
                  _
                $region60: #{hgcn_layer.5} parent=50 // loop_header
                  %s264 = sphi 0, %s268
                  %p265 = scmp.ge.s32.totalorder %s264, 1
                  %s269 = sphi %s218, %s218
                  %s270 = sphi %s215, %s215
                $region61: #{hgcn_layer.5} parent=50 // loop_header_branch
                  %267 = sbr.rel (%p265) target = $region65
                $region62: #{hgcn_layer.5} parent=50 // loop_body
                  %v271 = vld [vmem:[%s269] sm:%s262]
                  %272 = vst [vmem:[%s270] sm:%s262] %v271
                  %v273 = vld [vmem:[%s269 + $0x4] sm:%s262]
                  %274 = vst [vmem:[%s270 + $0x4] sm:%s262] %v273
                  %v275 = vld [vmem:[%s269 + $0x8] sm:%s262]
                  %276 = vst [vmem:[%s270 + $0x8] sm:%s262] %v275
                  %v277 = vld [vmem:[%s269 + $0xc] sm:%s262]
                  %278 = vst [vmem:[%s270 + $0xc] sm:%s262] %v277
                  %v279 = vld [vmem:[%s269 + $0x40] sm:%s262]
                  %280 = vst [vmem:[%s270 + $0x10] sm:%s262] %v279
                  %v281 = vld [vmem:[%s269 + $0x44] sm:%s262]
                  %282 = vst [vmem:[%s270 + $0x14] sm:%s262] %v281
                  %v283 = vld [vmem:[%s269 + $0x48] sm:%s262]
                  %284 = vst [vmem:[%s270 + $0x18] sm:%s262] %v283
                  %v285 = vld [vmem:[%s269 + $0x4c] sm:%s262]
                  %286 = vst [vmem:[%s270 + $0x1c] sm:%s262] %v285
                $region63: #{hgcn_layer.5} parent=50 // loop_footer
                  %s268 = sadd.s32 1, %s264
                $region64: #{hgcn_layer.5} parent=50 // loop_footer_branch
                  %263 = sbr.rel target = $region60
                $region65: #{hgcn_layer.5} parent=50 // loop_exit
                  _
              $region51: #{hgcn_layer.5} parent=35 // pred_fallthru
                _
            $region36: #{hgcn_layer.5} parent=31 // pred_fallthru
              _
            // Predicated region
            $region37: #{hgcn_layer.5} parent=31 // pred_check
              _
            $region38: #{hgcn_layer.5} parent=31 // pred_check_branch
              %224 = sbr.rel (0) target = $region40
            $region39: #{hgcn_layer.5} parent=31 // pred_region
              %s226 = ssub.s32 16, 1
              loop: start=0, step=1, limit=1
              $region41: #{hgcn_layer.5} parent=39 // loop_pre_header
                _
              $region42: #{hgcn_layer.5} parent=39 // loop_header
                %s228 = sphi 0, %s232
                %p229 = scmp.ge.s32.totalorder %s228, 1
                %s233 = sphi %s218, %s218
                %s234 = sphi %s215, %s215
              $region43: #{hgcn_layer.5} parent=39 // loop_header_branch
                %231 = sbr.rel (%p229) target = $region47
              $region44: #{hgcn_layer.5} parent=39 // loop_body
                %v235 = vld [vmem:[%s233] sm:%s226]
                %236 = vst [vmem:[%s234] sm:%s226] %v235
                %v237 = vld [vmem:[%s233 + $0x4] sm:%s226]
                %238 = vst [vmem:[%s234 + $0x4] sm:%s226] %v237
                %v239 = vld [vmem:[%s233 + $0x8] sm:%s226]
                %240 = vst [vmem:[%s234 + $0x8] sm:%s226] %v239
                %v241 = vld [vmem:[%s233 + $0xc] sm:%s226]
                %242 = vst [vmem:[%s234 + $0xc] sm:%s226] %v241
                %v243 = vld [vmem:[%s233 + $0x40] sm:%s226]
                %244 = vst [vmem:[%s234 + $0x10] sm:%s226] %v243
                %v245 = vld [vmem:[%s233 + $0x44] sm:%s226]
                %246 = vst [vmem:[%s234 + $0x14] sm:%s226] %v245
                %v247 = vld [vmem:[%s233 + $0x48] sm:%s226]
                %248 = vst [vmem:[%s234 + $0x18] sm:%s226] %v247
                %v249 = vld [vmem:[%s233 + $0x4c] sm:%s226]
                %250 = vst [vmem:[%s234 + $0x1c] sm:%s226] %v249
              $region45: #{hgcn_layer.5} parent=39 // loop_footer
                %s232 = sadd.s32 1, %s228
              $region46: #{hgcn_layer.5} parent=39 // loop_footer_branch
                %227 = sbr.rel target = $region42
              $region47: #{hgcn_layer.5} parent=39 // loop_exit
                _
            $region40: #{hgcn_layer.5} parent=31 // pred_fallthru
              _
          $region32: #{hgcn_layer.5} parent=27 // pred_fallthru
            _
          %287 = vnop
        $region28: #{hgcn_layer.5} parent=23 // pred_fallthru
          _
        // Predicated region
        $region66: #{hgcn_layer.5} parent=23 // pred_check
          %p288 = pneg %p79
        $region67: #{hgcn_layer.5} parent=23 // pred_check_branch
          %290 = sbr.rel (%p288) target = $region69
        $region68: #{hgcn_layer.5} parent=23 // pred_region
          %s291 = sand.u32 %s69, 1
          %s292 = sand.u32 %s69, 1
          %s293 = smul.addr %s292, 32
          %s294 = scalar_lea.vmem [#allocation3], %s293
          %s295 = smul.u32 4, %s12
          %s296 = smul.addr %s295, 4
          %s297 = scalar_lea.vmem %s2, %s296
          // Predicated region
          $region70: #{hgcn_layer.5} parent=68 // pred_check
            _
          $region71: #{hgcn_layer.5} parent=68 // pred_check_branch
            %299 = sbr.rel (0) target = $region73
          $region72: #{hgcn_layer.5} parent=68 // pred_region
            // Predicated region
            $region74: #{hgcn_layer.5} parent=72 // pred_check
              _
            $region75: #{hgcn_layer.5} parent=72 // pred_check_branch
              %301 = sbr.rel target = $region77
            $region76: #{hgcn_layer.5} parent=72 // pred_region
              // Predicated region
              $region89: #{hgcn_layer.5} parent=76 // pred_check
                _
              $region90: #{hgcn_layer.5} parent=76 // pred_check_branch
                %331 = sbr.rel (0) target = $region92
              $region91: #{hgcn_layer.5} parent=76 // pred_region
                loop: start=0, step=1, limit=1
                $region93: #{hgcn_layer.5} parent=91 // loop_pre_header
                  _
                $region94: #{hgcn_layer.5} parent=91 // loop_header
                  %s333 = sphi 0, %s337
                  %p334 = scmp.ge.s32.totalorder %s333, 1
                  %s338 = sphi %s297, %s297
                  %s339 = sphi %s294, %s294
                $region95: #{hgcn_layer.5} parent=91 // loop_header_branch
                  %336 = sbr.rel (%p334) target = $region99
                $region96: #{hgcn_layer.5} parent=91 // loop_body
                  _
                $region97: #{hgcn_layer.5} parent=91 // loop_footer
                  %s337 = sadd.s32 1, %s333
                $region98: #{hgcn_layer.5} parent=91 // loop_footer_branch
                  %332 = sbr.rel target = $region94
                $region99: #{hgcn_layer.5} parent=91 // loop_exit
                  _
                %s341 = ssub.s32 16, 1
                loop: start=0, step=1, limit=1
                $region100: #{hgcn_layer.5} parent=91 // loop_pre_header
                  _
                $region101: #{hgcn_layer.5} parent=91 // loop_header
                  %s343 = sphi 0, %s347
                  %p344 = scmp.ge.s32.totalorder %s343, 1
                  %s348 = sphi %s297, %s297
                  %s349 = sphi %s294, %s294
                $region102: #{hgcn_layer.5} parent=91 // loop_header_branch
                  %346 = sbr.rel (%p344) target = $region106
                $region103: #{hgcn_layer.5} parent=91 // loop_body
                  %v350 = vld [vmem:[%s348] sm:%s341]
                  %351 = vst [vmem:[%s349] sm:%s341] %v350
                  %v352 = vld [vmem:[%s348 + $0x4] sm:%s341]
                  %353 = vst [vmem:[%s349 + $0x4] sm:%s341] %v352
                  %v354 = vld [vmem:[%s348 + $0x8] sm:%s341]
                  %355 = vst [vmem:[%s349 + $0x8] sm:%s341] %v354
                  %v356 = vld [vmem:[%s348 + $0xc] sm:%s341]
                  %357 = vst [vmem:[%s349 + $0xc] sm:%s341] %v356
                  %v358 = vld [vmem:[%s348 + $0x40] sm:%s341]
                  %359 = vst [vmem:[%s349 + $0x10] sm:%s341] %v358
                  %v360 = vld [vmem:[%s348 + $0x44] sm:%s341]
                  %361 = vst [vmem:[%s349 + $0x14] sm:%s341] %v360
                  %v362 = vld [vmem:[%s348 + $0x48] sm:%s341]
                  %363 = vst [vmem:[%s349 + $0x18] sm:%s341] %v362
                  %v364 = vld [vmem:[%s348 + $0x4c] sm:%s341]
                  %365 = vst [vmem:[%s349 + $0x1c] sm:%s341] %v364
                $region104: #{hgcn_layer.5} parent=91 // loop_footer
                  %s347 = sadd.s32 1, %s343
                $region105: #{hgcn_layer.5} parent=91 // loop_footer_branch
                  %342 = sbr.rel target = $region101
                $region106: #{hgcn_layer.5} parent=91 // loop_exit
                  _
              $region92: #{hgcn_layer.5} parent=76 // pred_fallthru
                _
            $region77: #{hgcn_layer.5} parent=72 // pred_fallthru
              _
            // Predicated region
            $region78: #{hgcn_layer.5} parent=72 // pred_check
              _
            $region79: #{hgcn_layer.5} parent=72 // pred_check_branch
              %303 = sbr.rel (0) target = $region81
            $region80: #{hgcn_layer.5} parent=72 // pred_region
              %s305 = ssub.s32 16, 1
              loop: start=0, step=1, limit=1
              $region82: #{hgcn_layer.5} parent=80 // loop_pre_header
                _
              $region83: #{hgcn_layer.5} parent=80 // loop_header
                %s307 = sphi 0, %s311
                %p308 = scmp.ge.s32.totalorder %s307, 1
                %s312 = sphi %s297, %s297
                %s313 = sphi %s294, %s294
              $region84: #{hgcn_layer.5} parent=80 // loop_header_branch
                %310 = sbr.rel (%p308) target = $region88
              $region85: #{hgcn_layer.5} parent=80 // loop_body
                %v314 = vld [vmem:[%s312] sm:%s305]
                %315 = vst [vmem:[%s313] sm:%s305] %v314
                %v316 = vld [vmem:[%s312 + $0x4] sm:%s305]
                %317 = vst [vmem:[%s313 + $0x4] sm:%s305] %v316
                %v318 = vld [vmem:[%s312 + $0x8] sm:%s305]
                %319 = vst [vmem:[%s313 + $0x8] sm:%s305] %v318
                %v320 = vld [vmem:[%s312 + $0xc] sm:%s305]
                %321 = vst [vmem:[%s313 + $0xc] sm:%s305] %v320
                %v322 = vld [vmem:[%s312 + $0x40] sm:%s305]
                %323 = vst [vmem:[%s313 + $0x10] sm:%s305] %v322
                %v324 = vld [vmem:[%s312 + $0x44] sm:%s305]
                %325 = vst [vmem:[%s313 + $0x14] sm:%s305] %v324
                %v326 = vld [vmem:[%s312 + $0x48] sm:%s305]
                %327 = vst [vmem:[%s313 + $0x18] sm:%s305] %v326
                %v328 = vld [vmem:[%s312 + $0x4c] sm:%s305]
                %329 = vst [vmem:[%s313 + $0x1c] sm:%s305] %v328
              $region86: #{hgcn_layer.5} parent=80 // loop_footer
                %s311 = sadd.s32 1, %s307
              $region87: #{hgcn_layer.5} parent=80 // loop_footer_branch
                %306 = sbr.rel target = $region83
              $region88: #{hgcn_layer.5} parent=80 // loop_exit
                _
            $region81: #{hgcn_layer.5} parent=72 // pred_fallthru
              _
          $region73: #{hgcn_layer.5} parent=68 // pred_fallthru
            _
          %366 = vnop
        $region69: #{hgcn_layer.5} parent=23 // pred_fallthru
          _
        // Predicated region
        $region107: #{hgcn_layer.5} parent=23 // pred_check
          %p367 = pneg %p126
        $region108: #{hgcn_layer.5} parent=23 // pred_check_branch
          %369 = sbr.rel (%p367) target = $region110
        $region109: #{hgcn_layer.5} parent=23 // pred_region
          %s370 = smul.u32 4, %s12
          %p371 = scmp.lt.s32.totalorder %s370, 15
          %s372 = scalar_select %p371, %s370, 15
          %s373 = smul.addr %s372, 8
          %s374 = scalar_lea.vmem %s4, %s373
          %s375 = smul.u32 4, %s12
        $region110: #{hgcn_layer.5} parent=23 // pred_fallthru
          _
        // Predicated region
        $region111: #{hgcn_layer.5} parent=23 // pred_check
          %p376 = pneg %p152
        $region112: #{hgcn_layer.5} parent=23 // pred_check_branch
          %378 = sbr.rel (%p376) target = $region114
        $region113: #{hgcn_layer.5} parent=23 // pred_region
          %s379 = smul.u32 4, %s12
          %p380 = scmp.lt.s32.totalorder %s379, 15
          %s381 = scalar_select %p380, %s379, 15
          %s382 = smul.addr %s381, 8
          %s383 = scalar_lea.vmem %s5, %s382
          %s384 = smul.u32 4, %s12
        $region114: #{hgcn_layer.5} parent=23 // pred_fallthru
          _
      $region24: #{hgcn_layer.5} parent=5 // pred_fallthru
        _
      %p385 = scmp.le.s32.totalorder 1, %s12
      %p386 = scmp.lt.s32.totalorder %s12, 5
      %p387 = pnand %p385, %p386
      %p388 = pneg %p387
      // Predicated region
      $region115: #{hgcn_layer.5} parent=5 // pred_check
        _
      $region116: #{hgcn_layer.5} parent=5 // pred_check_branch
        %390 = sbr.rel (%p387) target = $region118
      $region117: #{hgcn_layer.5} parent=5 // pred_region
        %s391 = ssub.s32 %s12, 1
        %s392 = sand.u32 %s46, 1
        %s393 = sand.u32 %s46, 1
        %s394 = smul.addr %s393, 32
        %s395 = scalar_lea.vmem [#allocation2], %s394
        // Predicated region
        $region119: #{hgcn_layer.5} parent=117 // pred_check
          %p396 = pneg %p59
        $region120: #{hgcn_layer.5} parent=117 // pred_check_branch
          %398 = sbr.rel (%p396) target = $region122
        $region121: #{hgcn_layer.5} parent=117 // pred_region
          _
        $region122: #{hgcn_layer.5} parent=117 // pred_fallthru
          _
        %s399 = sand.u32 %s72, 1
        %s400 = sand.u32 %s72, 1
        %s401 = smul.addr %s400, 32
        %s402 = scalar_lea.vmem [#allocation3], %s401
        // Predicated region
        $region123: #{hgcn_layer.5} parent=117 // pred_check
          %p403 = pneg %p85
        $region124: #{hgcn_layer.5} parent=117 // pred_check_branch
          %405 = sbr.rel (%p403) target = $region126
        $region125: #{hgcn_layer.5} parent=117 // pred_region
          _
        $region126: #{hgcn_layer.5} parent=117 // pred_fallthru
          _
        %p406 = pneg %p33
        %p407 = pneg %p30
        %s408 = sand.u32 %s46, 1
        %s409 = sand.u32 %s46, 1
        %s410 = smul.addr %s409, 32
        %s411 = scalar_lea.vmem [#allocation2], %s410
        %p412 = pneg %p59
        %p413 = pneg %p56
        %s414 = sand.u32 %s72, 1
        %s415 = sand.u32 %s72, 1
        %s416 = smul.addr %s415, 32
        %s417 = scalar_lea.vmem [#allocation3], %s416
        %p418 = pneg %p85
        %p419 = pneg %p82
        %p420 = pneg %p106
        %p421 = pneg %p103
        %s422 = smul.u32 4, %s17
        %p423 = scmp.lt.s32.totalorder %s422, 15
        %s424 = scalar_select %p423, %s422, 15
        %s425 = smul.addr %s424, 8
        %s426 = scalar_lea.vmem %s4, %s425
        %p427 = pneg %p132
        %p428 = pneg %p129
        %s429 = smul.u32 4, %s17
        %p430 = scmp.lt.s32.totalorder %s429, 15
        %s431 = scalar_select %p430, %s429, 15
        %s432 = smul.addr %s431, 8
        %s433 = scalar_lea.vmem %s5, %s432
        %p434 = pneg %p158
        %p435 = pneg %p155
        %p436 = pneg %p184
        %p437 = pneg %p181
        %s438 = sand.u32 %s171, 1
        %s439 = sand.u32 %s171, 1
        %s440 = smul.addr %s439, 64
        %s441 = scalar_lea.vmem [#allocation4], %s440
        %s442 = smul.u32 4, %s17
        %s443 = smul.u32 4, %s17
        %s444 = smul.u32 4, %s17
        %p445 = scmp.lt.s32.totalorder %s444, 15
        %s446 = scalar_select %p445, %s444, 15
        %s447 = smul.addr %s446, 8
        %s448 = scalar_lea.vmem %s4, %s447
        %s449 = smul.u32 4, %s17
        %s450 = smul.u32 4, %s17
        %p451 = scmp.lt.s32.totalorder %s450, 15
        %s452 = scalar_select %p451, %s450, 15
        %s453 = smul.addr %s452, 8
        %s454 = scalar_lea.vmem %s5, %s453
        %s455 = smul.u32 4, %s17
        %s456 = smul.u32 4, %s17
        %v458 = vld [vmem:[%s0] sm:$0xf]
        %v459 = vld [vmem:[%s0 + $0x4] sm:$0xf]
        %v460 = vld [vmem:[%s0 + $0x8] sm:$0xf]
        %v461 = vld [vmem:[%s0 + $0xc] sm:$0xf]
        %v462 = vld [vmem:[%s0 + $0x10] sm:$0xf]
        %v463 = vld [vmem:[%s0 + $0x14] sm:$0xf]
        %v464 = vld [vmem:[%s0 + $0x18] sm:$0xf]
        %v465 = vld [vmem:[%s0 + $0x1c] sm:$0xf]
        %v466 = vld [vmem:[%s0 + $0x20] sm:$0xf]
        %v467 = vld [vmem:[%s0 + $0x24] sm:$0xf]
        %v468 = vld [vmem:[%s0 + $0x28] sm:$0xf]
        %v469 = vld [vmem:[%s0 + $0x2c] sm:$0xf]
        %v470 = vld [vmem:[%s0 + $0x30] sm:$0xf]
        %v471 = vld [vmem:[%s0 + $0x34] sm:$0xf]
        %v472 = vld [vmem:[%s0 + $0x38] sm:$0xf]
        %v473 = vld [vmem:[%s0 + $0x3c] sm:$0xf]
        %v474 = vld [vmem:[%s0 + $0x40] sm:$0xf]
        %v475 = vld [vmem:[%s0 + $0x44] sm:$0xf]
        %v476 = vld [vmem:[%s0 + $0x48] sm:$0xf]
        %v477 = vld [vmem:[%s0 + $0x4c] sm:$0xf]
        %v478 = vld [vmem:[%s0 + $0x50] sm:$0xf]
        %v479 = vld [vmem:[%s0 + $0x54] sm:$0xf]
        %v480 = vld [vmem:[%s0 + $0x58] sm:$0xf]
        %v481 = vld [vmem:[%s0 + $0x5c] sm:$0xf]
        %v482 = vld [vmem:[%s0 + $0x60] sm:$0xf]
        %v483 = vld [vmem:[%s0 + $0x64] sm:$0xf]
        %v484 = vld [vmem:[%s0 + $0x68] sm:$0xf]
        %v485 = vld [vmem:[%s0 + $0x6c] sm:$0xf]
        %v486 = vld [vmem:[%s0 + $0x70] sm:$0xf]
        %v487 = vld [vmem:[%s0 + $0x74] sm:$0xf]
        %v488 = vld [vmem:[%s0 + $0x78] sm:$0xf]
        %v489 = vld [vmem:[%s0 + $0x7c] sm:$0xf]
        %v490 = vld [vmem:[%s395] sm:$0xf]
        %v491 = vld [vmem:[%s395 + $0x4] sm:$0xf]
        %v492 = vld [vmem:[%s395 + $0x8] sm:$0xf]
        %v493 = vld [vmem:[%s395 + $0xc] sm:$0xf]
        %v494 = vld [vmem:[%s395 + $0x10] sm:$0xf]
        %v495 = vld [vmem:[%s395 + $0x14] sm:$0xf]
        %v496 = vld [vmem:[%s395 + $0x18] sm:$0xf]
        %v497 = vld [vmem:[%s395 + $0x1c] sm:$0xf]
        %v498 = vld [vmem:[%s3] sm:$0xf]
        %v499 = vld [vmem:[%s3 + $0x4] sm:$0xf]
        %v500 = vld [vmem:[%s3 + $0x8] sm:$0xf]
        %v501 = vld [vmem:[%s3 + $0xc] sm:$0xf]
        %v506 = vunpack.c.l.b16 %v490
        %v507 = vunpack.c.l.b16 %v491
        %v508 = vunpack.c.l.b16 %v492
        %v509 = vunpack.c.l.b16 %v493
        %v510 = vpack.c.b16 %v507, %v506
        %v511 = vpack.c.b16 %v509, %v508
        %v530 = vunpack.c.l.b16 %v458
        %v531 = vunpack.c.l.b16 %v459
        %v532 = vunpack.c.l.b16 %v460
        %v533 = vunpack.c.l.b16 %v461
        %v534 = vunpack.c.l.b16 %v462
        %v535 = vunpack.c.l.b16 %v463
        %v536 = vunpack.c.l.b16 %v464
        %v537 = vunpack.c.l.b16 %v465
        %v538 = vunpack.c.l.b16 %v466
        %v539 = vunpack.c.l.b16 %v467
        %v540 = vunpack.c.l.b16 %v468
        %v541 = vunpack.c.l.b16 %v469
        %v542 = vunpack.c.l.b16 %v470
        %v543 = vunpack.c.l.b16 %v471
        %v544 = vunpack.c.l.b16 %v472
        %v545 = vunpack.c.l.b16 %v473
        %v546 = vpack.c.b16 %v531, %v530
        %v547 = vpack.c.b16 %v533, %v532
        %v548 = vpack.c.b16 %v535, %v534
        %v549 = vpack.c.b16 %v537, %v536
        %v550 = vpack.c.b16 %v539, %v538
        %v551 = vpack.c.b16 %v541, %v540
        %v552 = vpack.c.b16 %v543, %v542
        %v553 = vpack.c.b16 %v545, %v544
        %562 = vmatpush.bf16.msra.mxu0 %v553
        %563 = vmatpush.bf16.msra.mxu0 %v552
        %564 = vmatpush.bf16.msra.mxu0 %v551
        %565 = vmatpush.bf16.msra.mxu0 %v550
        %566 = vmatpush.bf16.msra.mxu0 %v549
        %567 = vmatpush.bf16.msra.mxu0 %v548
        %568 = vmatpush.bf16.msra.mxu0 %v547
        %569 = vmatpush.bf16.msra.mxu0 %v546
        %570 = vmatmul.bf16.gmra.mxu0 %v510
        %v571 = vpop.f32.mrf.mxu0
        %v572 = vadd.f32 0.0, %v571
        %v573 = vpop.f32.mrf.mxu0
        %v574 = vadd.f32 0.0, %v573
        %575 = vmatmul.bf16.gmra.mxu0 %v511
        %v576 = vpop.f32.mrf.mxu0
        %v577 = vadd.f32 0.0, %v576
        %v578 = vpop.f32.mrf.mxu0
        %v579 = vadd.f32 0.0, %v578
        %580 = vdwg.mxu0
        %v585 = vunpack.c.l.b16 %v494
        %v586 = vunpack.c.l.b16 %v495
        %v587 = vunpack.c.l.b16 %v496
        %v588 = vunpack.c.l.b16 %v497
        %v589 = vpack.c.b16 %v586, %v585
        %v590 = vpack.c.b16 %v588, %v587
        %v609 = vunpack.c.l.b16 %v474
        %v610 = vunpack.c.l.b16 %v475
        %v611 = vunpack.c.l.b16 %v476
        %v612 = vunpack.c.l.b16 %v477
        %v613 = vunpack.c.l.b16 %v478
        %v614 = vunpack.c.l.b16 %v479
        %v615 = vunpack.c.l.b16 %v480
        %v616 = vunpack.c.l.b16 %v481
        %v617 = vunpack.c.l.b16 %v482
        %v618 = vunpack.c.l.b16 %v483
        %v619 = vunpack.c.l.b16 %v484
        %v620 = vunpack.c.l.b16 %v485
        %v621 = vunpack.c.l.b16 %v486
        %v622 = vunpack.c.l.b16 %v487
        %v623 = vunpack.c.l.b16 %v488
        %v624 = vunpack.c.l.b16 %v489
        %v625 = vpack.c.b16 %v610, %v609
        %v626 = vpack.c.b16 %v612, %v611
        %v627 = vpack.c.b16 %v614, %v613
        %v628 = vpack.c.b16 %v616, %v615
        %v629 = vpack.c.b16 %v618, %v617
        %v630 = vpack.c.b16 %v620, %v619
        %v631 = vpack.c.b16 %v622, %v621
        %v632 = vpack.c.b16 %v624, %v623
        %641 = vmatpush.bf16.msra.mxu0 %v632
        %642 = vmatpush.bf16.msra.mxu0 %v631
        %643 = vmatpush.bf16.msra.mxu0 %v630
        %644 = vmatpush.bf16.msra.mxu0 %v629
        %645 = vmatpush.bf16.msra.mxu0 %v628
        %646 = vmatpush.bf16.msra.mxu0 %v627
        %647 = vmatpush.bf16.msra.mxu0 %v626
        %648 = vmatpush.bf16.msra.mxu0 %v625
        %649 = vmatmul.bf16.gmra.mxu0 %v589
        %v650 = vpop.f32.mrf.mxu0
        %v651 = vadd.f32 0.0, %v650
        %v652 = vpop.f32.mrf.mxu0
        %v653 = vadd.f32 0.0, %v652
        %654 = vmatmul.bf16.gmra.mxu0 %v590
        %v655 = vpop.f32.mrf.mxu0
        %v656 = vadd.f32 0.0, %v655
        %v657 = vpop.f32.mrf.mxu0
        %v658 = vadd.f32 0.0, %v657
        %659 = vdwg.mxu0
        %v660 = vpack.c.bf16 %v574, %v572
        %v661 = vpack.c.bf16 %v579, %v577
        %v662 = vpack.c.bf16 %v653, %v651
        %v663 = vpack.c.bf16 %v658, %v656
        %v668 = vunpack.c.l.b16 %v498
        %v669 = vunpack.c.l.b16 %v499
        %v670 = vunpack.c.l.b16 %v500
        %v671 = vunpack.c.l.b16 %v501
        %v672 = vpack.c.b16 %v669, %v668
        %v673 = vpack.c.b16 %v671, %v670
        %vm676 = vcmask 261120
        %v678 = vsel %vm676, %v660, 0
        %v681 = vsel %vm676, %v661, 0
        %v684 = vsel %vm676, %v662, 0
        %v687 = vsel %vm676, %v663, 0
        %689 = vmatpush.bf16.msra.mxu0 0
        %690 = vmatpush.bf16.msra.mxu0 0
        %691 = vmatpush.bf16.msra.mxu0 0
        %692 = vmatpush.bf16.msra.mxu0 0
        %693 = vmatpush.bf16.msra.mxu0 0
        %694 = vmatpush.bf16.msra.mxu0 0
        %695 = vmatpush.bf16.msra.mxu0 %v673
        %696 = vmatpush.bf16.msra.mxu0 %v672
        %697 = vmatmul.bf16.gmra.mxu0 %v678
        %v698 = vpop.f32.mrf.mxu0
        %v699 = vadd.f32 0.0, %v698
        %v700 = vpop.f32.mrf.mxu0
        %v701 = vadd.f32 0.0, %v700
        %702 = vmatmul.bf16.gmra.mxu0 %v681
        %v703 = vpop.f32.mrf.mxu0
        %v704 = vadd.f32 0.0, %v703
        %v705 = vpop.f32.mrf.mxu0
        %v706 = vadd.f32 0.0, %v705
        %707 = vmatmul.bf16.gmra.mxu0 %v684
        %v708 = vpop.f32.mrf.mxu0
        %v709 = vadd.f32 0.0, %v708
        %v710 = vpop.f32.mrf.mxu0
        %v711 = vadd.f32 0.0, %v710
        %712 = vmatmul.bf16.gmra.mxu0 %v687
        %v713 = vpop.f32.mrf.mxu0
        %v714 = vadd.f32 0.0, %v713
        %v715 = vpop.f32.mrf.mxu0
        %v716 = vadd.f32 0.0, %v715
        %717 = vdwg.mxu0
        %v718 = vsel %vm676, %v699, 0.0
        %v719 = vsel %vm676, %v709, 0.0
        %v720 = vadd.f32 %v718, %v719
        %721 = vadd.xlane.f32.xlu0 %v720
        %v722 = vpop.xlane.xlu0 %721
        %v723 = vsel %vm676, %v701, 0.0
        %v724 = vsel %vm676, %v711, 0.0
        %v725 = vadd.f32 %v723, %v724
        %726 = vadd.xlane.f32.xlu0 %v725
        %v727 = vpop.xlane.xlu0 %726
        %v728 = vsel %vm676, %v704, 0.0
        %v729 = vsel %vm676, %v714, 0.0
        %v730 = vadd.f32 %v728, %v729
        %731 = vadd.xlane.f32.xlu0 %v730
        %v732 = vpop.xlane.xlu0 %731
        %v733 = vsel %vm676, %v706, 0.0
        %v734 = vsel %vm676, %v716, 0.0
        %v735 = vadd.f32 %v733, %v734
        %736 = vadd.xlane.f32.xlu0 %v735
        %v737 = vpop.xlane.xlu0 %736
        %v738 = vmul.f32 %v699, %v699
        %v739 = vmul.f32 %v701, %v701
        %v740 = vmul.f32 %v704, %v704
        %v741 = vmul.f32 %v706, %v706
        %v742 = vmul.f32 %v709, %v709
        %v743 = vmul.f32 %v711, %v711
        %v744 = vmul.f32 %v714, %v714
        %v745 = vmul.f32 %v716, %v716
        %v746 = vsel %vm676, %v738, 0.0
        %v747 = vsel %vm676, %v742, 0.0
        %v748 = vadd.f32 %v746, %v747
        %749 = vadd.xlane.f32.xlu0 %v748
        %v750 = vpop.xlane.xlu0 %749
        %v751 = vsel %vm676, %v739, 0.0
        %v752 = vsel %vm676, %v743, 0.0
        %v753 = vadd.f32 %v751, %v752
        %754 = vadd.xlane.f32.xlu0 %v753
        %v755 = vpop.xlane.xlu0 %754
        %v756 = vsel %vm676, %v740, 0.0
        %v757 = vsel %vm676, %v744, 0.0
        %v758 = vadd.f32 %v756, %v757
        %759 = vadd.xlane.f32.xlu0 %v758
        %v760 = vpop.xlane.xlu0 %759
        %v761 = vsel %vm676, %v741, 0.0
        %v762 = vsel %vm676, %v745, 0.0
        %v763 = vadd.f32 %v761, %v762
        %764 = vadd.xlane.f32.xlu0 %v763
        %v765 = vpop.xlane.xlu0 %764
        %v766 = vrcp.pop 64.0
        %v767 = vmul.f32 64.0, %v766
        %v768 = vsub.f32 1.0, %v767
        %v769 = vmul.f32 %v766, %v768
        %v770 = vadd.f32 %v766, %v769
        %vm771 = vweird.f32 %v766
        %v772 = vsel %vm771, %v766, %v770
        %v773 = vmul.f32 %v722, %v772
        %v774 = vmul.f32 %v727, %v772
        %v775 = vmul.f32 %v732, %v772
        %v776 = vmul.f32 %v737, %v772
        %v777 = vmul.f32 %v750, %v772
        %v778 = vmul.f32 %v755, %v772
        %v779 = vmul.f32 %v760, %v772
        %v780 = vmul.f32 %v765, %v772
        %v781 = vmul.f32 %v773, %v773
        %v782 = vmul.f32 %v774, %v774
        %v783 = vmul.f32 %v775, %v775
        %v784 = vmul.f32 %v776, %v776
        %v785 = vsub.f32 %v777, %v781
        %v786 = vsub.f32 %v778, %v782
        %v787 = vsub.f32 %v779, %v783
        %v788 = vsub.f32 %v780, %v784
        %v789 = vadd.f32 %v785, 1e-05
        %v790 = vadd.f32 %v786, 1e-05
        %v791 = vadd.f32 %v787, 1e-05
        %v792 = vadd.f32 %v788, 1e-05
        %v793 = vrsqrt.pop %v789
        %v794 = vmul.f32 %v793, %v789
        %v795 = vmul.f32 %v794, %v793
        %v796 = vmul.f32 0.5, %v795
        %v797 = vsub.f32 1.5, %v796
        %v798 = vmul.f32 %v793, %v797
        %vm799 = vweird.f32 %v789
        %vm800 = vweird.f32 %v793
        %vm801 = vmor %vm799, %vm800
        %v802 = vsel %vm801, %v793, %v798
        %v803 = vrsqrt.pop %v790
        %v804 = vmul.f32 %v803, %v790
        %v805 = vmul.f32 %v804, %v803
        %v806 = vmul.f32 0.5, %v805
        %v807 = vsub.f32 1.5, %v806
        %v808 = vmul.f32 %v803, %v807
        %vm809 = vweird.f32 %v790
        %vm810 = vweird.f32 %v803
        %vm811 = vmor %vm809, %vm810
        %v812 = vsel %vm811, %v803, %v808
        %v813 = vrsqrt.pop %v791
        %v814 = vmul.f32 %v813, %v791
        %v815 = vmul.f32 %v814, %v813
        %v816 = vmul.f32 0.5, %v815
        %v817 = vsub.f32 1.5, %v816
        %v818 = vmul.f32 %v813, %v817
        %vm819 = vweird.f32 %v791
        %vm820 = vweird.f32 %v813
        %vm821 = vmor %vm819, %vm820
        %v822 = vsel %vm821, %v813, %v818
        %v823 = vrsqrt.pop %v792
        %v824 = vmul.f32 %v823, %v792
        %v825 = vmul.f32 %v824, %v823
        %v826 = vmul.f32 0.5, %v825
        %v827 = vsub.f32 1.5, %v826
        %v828 = vmul.f32 %v823, %v827
        %vm829 = vweird.f32 %v792
        %vm830 = vweird.f32 %v823
        %vm831 = vmor %vm829, %vm830
        %v832 = vsel %vm831, %v823, %v828
        %v833 = vld [vmem:[%s448] sm:$0xff]
        %v834 = vld [vmem:[%s448 + $0x8] sm:$0xff]
        %v835 = vld [vmem:[%s448 + $0x10] sm:$0xff]
        %v836 = vld [vmem:[%s448 + $0x18] sm:$0xff]
        %v837 = vld [vmem:[%s454] sm:$0xff]
        %v838 = vld [vmem:[%s454 + $0x8] sm:$0xff]
        %v839 = vld [vmem:[%s454 + $0x10] sm:$0xff]
        %v840 = vld [vmem:[%s454 + $0x18] sm:$0xff]
        %v841 = vsub.f32 %v699, %v773
        %v842 = vsub.f32 %v701, %v774
        %v843 = vsub.f32 %v704, %v775
        %v844 = vsub.f32 %v706, %v776
        %v845 = vsub.f32 %v709, %v773
        %v846 = vsub.f32 %v711, %v774
        %v847 = vsub.f32 %v714, %v775
        %v848 = vsub.f32 %v716, %v776
        %v849 = vmul.f32 %v841, %v802
        %v850 = vmul.f32 %v842, %v812
        %v851 = vmul.f32 %v843, %v822
        %v852 = vmul.f32 %v844, %v832
        %v853 = vmul.f32 %v845, %v802
        %v854 = vmul.f32 %v846, %v812
        %v855 = vmul.f32 %v847, %v822
        %v856 = vmul.f32 %v848, %v832
        %858 = vset.pattern.permute.xlu0 0
        %859 = vperm.xlu0 %858, %v833
        %v860 = vpop.permute.xlu0 %859
        %863 = vset.pattern.permute.xlu0 0
        %864 = vperm.xlu0 %863, %v834
        %v865 = vpop.permute.xlu0 %864
        %868 = vset.pattern.permute.xlu0 0
        %869 = vperm.xlu0 %868, %v835
        %v870 = vpop.permute.xlu0 %869
        %873 = vset.pattern.permute.xlu0 0
        %874 = vperm.xlu0 %873, %v836
        %v875 = vpop.permute.xlu0 %874
        %v877 = vmul.f32 %v849, %v860
        %v878 = vmul.f32 %v850, %v865
        %v879 = vmul.f32 %v851, %v870
        %v880 = vmul.f32 %v852, %v875
        %v881 = vmul.f32 %v853, %v860
        %v882 = vmul.f32 %v854, %v865
        %v883 = vmul.f32 %v855, %v870
        %v884 = vmul.f32 %v856, %v875
        %886 = vset.pattern.permute.xlu0 0
        %887 = vperm.xlu0 %886, %v837
        %v888 = vpop.permute.xlu0 %887
        %891 = vset.pattern.permute.xlu0 0
        %892 = vperm.xlu0 %891, %v838
        %v893 = vpop.permute.xlu0 %892
        %896 = vset.pattern.permute.xlu0 0
        %897 = vperm.xlu0 %896, %v839
        %v898 = vpop.permute.xlu0 %897
        %901 = vset.pattern.permute.xlu0 0
        %902 = vperm.xlu0 %901, %v840
        %v903 = vpop.permute.xlu0 %902
        %v905 = vadd.f32 %v877, %v888
        %v906 = vadd.f32 %v878, %v893
        %v907 = vadd.f32 %v879, %v898
        %v908 = vadd.f32 %v880, %v903
        %v909 = vadd.f32 %v881, %v888
        %v910 = vadd.f32 %v882, %v893
        %v911 = vadd.f32 %v883, %v898
        %v912 = vadd.f32 %v884, %v903
        %v913 = vld [vmem:[%s402] sm:$0xf]
        %v914 = vld [vmem:[%s402 + $0x4] sm:$0xf]
        %v915 = vld [vmem:[%s402 + $0x8] sm:$0xf]
        %v916 = vld [vmem:[%s402 + $0xc] sm:$0xf]
        %v917 = vld [vmem:[%s402 + $0x10] sm:$0xf]
        %v918 = vld [vmem:[%s402 + $0x14] sm:$0xf]
        %v919 = vld [vmem:[%s402 + $0x18] sm:$0xf]
        %v920 = vld [vmem:[%s402 + $0x1c] sm:$0xf]
        %v921 = vunpack.c.l.bf16 %v913
        %v922 = vunpack.c.l.bf16 %v914
        %v923 = vunpack.c.l.bf16 %v915
        %v924 = vunpack.c.l.bf16 %v916
        %v925 = vunpack.c.l.bf16 %v917
        %v926 = vunpack.c.l.bf16 %v918
        %v927 = vunpack.c.l.bf16 %v919
        %v928 = vunpack.c.l.bf16 %v920
        %v929 = vadd.f32 %v921, %v905
        %v930 = vadd.f32 %v922, %v906
        %v931 = vadd.f32 %v923, %v907
        %v932 = vadd.f32 %v924, %v908
        %v933 = vadd.f32 %v925, %v909
        %v934 = vadd.f32 %v926, %v910
        %v935 = vadd.f32 %v927, %v911
        %v936 = vadd.f32 %v928, %v912
        %vm937 = vcmp.gt.f32.partialorder %v929, 20.0
        %vm938 = vcmp.gt.f32.partialorder %v930, 20.0
        %vm939 = vcmp.gt.f32.partialorder %v931, 20.0
        %vm940 = vcmp.gt.f32.partialorder %v932, 20.0
        %vm941 = vcmp.gt.f32.partialorder %v933, 20.0
        %vm942 = vcmp.gt.f32.partialorder %v934, 20.0
        %vm943 = vcmp.gt.f32.partialorder %v935, 20.0
        %vm944 = vcmp.gt.f32.partialorder %v936, 20.0
        %v945 = vmin.f32 %v929, 20.0
        %v946 = vmin.f32 %v930, 20.0
        %v947 = vmin.f32 %v931, 20.0
        %v948 = vmin.f32 %v932, 20.0
        %v949 = vmin.f32 %v933, 20.0
        %v950 = vmin.f32 %v934, 20.0
        %v951 = vmin.f32 %v935, 20.0
        %v952 = vmin.f32 %v936, 20.0
        %v953 = vmul.f32 %v945, 1.442695
        %v954 = vpow.pop %v953
        %v955 = vmul.f32 %v946, 1.442695
        %v956 = vpow.pop %v955
        %v957 = vmul.f32 %v947, 1.442695
        %v958 = vpow.pop %v957
        %v959 = vmul.f32 %v948, 1.442695
        %v960 = vpow.pop %v959
        %v961 = vmul.f32 %v949, 1.442695
        %v962 = vpow.pop %v961
        %v963 = vmul.f32 %v950, 1.442695
        %v964 = vpow.pop %v963
        %v965 = vmul.f32 %v951, 1.442695
        %v966 = vpow.pop %v965
        %v967 = vmul.f32 %v952, 1.442695
        %v968 = vpow.pop %v967
        %v969 = vadd.f32 %v954, 1.0
        %v970 = vlog2.pop %v969
        %v971 = vmul.f32 %v970, 0.6931472
        %v972 = vmul.f32 -0.5, %v954
        %v973 = vadd.f32 %v972, 1.0
        %v974 = vmul.f32 %v973, %v954
        %v975 = vand.u32 2147483647, %v954
        %vm976 = vcmp.lt.f32.partialorder %v975, 0.0004427343
        %v977 = vsel %vm976, %v974, %v971
        %v978 = vadd.f32 %v956, 1.0
        %v979 = vlog2.pop %v978
        %v980 = vmul.f32 %v979, 0.6931472
        %v981 = vmul.f32 -0.5, %v956
        %v982 = vadd.f32 %v981, 1.0
        %v983 = vmul.f32 %v982, %v956
        %v984 = vand.u32 2147483647, %v956
        %vm985 = vcmp.lt.f32.partialorder %v984, 0.0004427343
        %v986 = vsel %vm985, %v983, %v980
        %v987 = vadd.f32 %v958, 1.0
        %v988 = vlog2.pop %v987
        %v989 = vmul.f32 %v988, 0.6931472
        %v990 = vmul.f32 -0.5, %v958
        %v991 = vadd.f32 %v990, 1.0
        %v992 = vmul.f32 %v991, %v958
        %v993 = vand.u32 2147483647, %v958
        %vm994 = vcmp.lt.f32.partialorder %v993, 0.0004427343
        %v995 = vsel %vm994, %v992, %v989
        %v996 = vadd.f32 %v960, 1.0
        %v997 = vlog2.pop %v996
        %v998 = vmul.f32 %v997, 0.6931472
        %v999 = vmul.f32 -0.5, %v960
        %v1000 = vadd.f32 %v999, 1.0
        %v1001 = vmul.f32 %v1000, %v960
        %v1002 = vand.u32 2147483647, %v960
        %vm1003 = vcmp.lt.f32.partialorder %v1002, 0.0004427343
        %v1004 = vsel %vm1003, %v1001, %v998
        %v1005 = vadd.f32 %v962, 1.0
        %v1006 = vlog2.pop %v1005
        %v1007 = vmul.f32 %v1006, 0.6931472
        %v1008 = vmul.f32 -0.5, %v962
        %v1009 = vadd.f32 %v1008, 1.0
        %v1010 = vmul.f32 %v1009, %v962
        %v1011 = vand.u32 2147483647, %v962
        %vm1012 = vcmp.lt.f32.partialorder %v1011, 0.0004427343
        %v1013 = vsel %vm1012, %v1010, %v1007
        %v1014 = vadd.f32 %v964, 1.0
        %v1015 = vlog2.pop %v1014
        %v1016 = vmul.f32 %v1015, 0.6931472
        %v1017 = vmul.f32 -0.5, %v964
        %v1018 = vadd.f32 %v1017, 1.0
        %v1019 = vmul.f32 %v1018, %v964
        %v1020 = vand.u32 2147483647, %v964
        %vm1021 = vcmp.lt.f32.partialorder %v1020, 0.0004427343
        %v1022 = vsel %vm1021, %v1019, %v1016
        %v1023 = vadd.f32 %v966, 1.0
        %v1024 = vlog2.pop %v1023
        %v1025 = vmul.f32 %v1024, 0.6931472
        %v1026 = vmul.f32 -0.5, %v966
        %v1027 = vadd.f32 %v1026, 1.0
        %v1028 = vmul.f32 %v1027, %v966
        %v1029 = vand.u32 2147483647, %v966
        %vm1030 = vcmp.lt.f32.partialorder %v1029, 0.0004427343
        %v1031 = vsel %vm1030, %v1028, %v1025
        %v1032 = vadd.f32 %v968, 1.0
        %v1033 = vlog2.pop %v1032
        %v1034 = vmul.f32 %v1033, 0.6931472
        %v1035 = vmul.f32 -0.5, %v968
        %v1036 = vadd.f32 %v1035, 1.0
        %v1037 = vmul.f32 %v1036, %v968
        %v1038 = vand.u32 2147483647, %v968
        %vm1039 = vcmp.lt.f32.partialorder %v1038, 0.0004427343
        %v1040 = vsel %vm1039, %v1037, %v1034
        %v1041 = vsel %vm937, %v929, %v977
        %v1042 = vsel %vm938, %v930, %v986
        %v1043 = vsel %vm939, %v931, %v995
        %v1044 = vsel %vm940, %v932, %v1004
        %v1045 = vsel %vm941, %v933, %v1013
        %v1046 = vsel %vm942, %v934, %v1022
        %v1047 = vsel %vm943, %v935, %v1031
        %v1048 = vsel %vm944, %v936, %v1040
        %1049 = vst.msk [vmem:[%s441] sm:$0xff] %vm676, %v1041
        %1050 = vst.msk [vmem:[%s441 + $0x8] sm:$0xff] %vm676, %v1042
        %1051 = vst.msk [vmem:[%s441 + $0x10] sm:$0xff] %vm676, %v1043
        %1052 = vst.msk [vmem:[%s441 + $0x18] sm:$0xff] %vm676, %v1044
        %1053 = vst.msk [vmem:[%s441 + $0x20] sm:$0xff] %vm676, %v1045
        %1054 = vst.msk [vmem:[%s441 + $0x28] sm:$0xff] %vm676, %v1046
        %1055 = vst.msk [vmem:[%s441 + $0x30] sm:$0xff] %vm676, %v1047
        %1056 = vst.msk [vmem:[%s441 + $0x38] sm:$0xff] %vm676, %v1048
        %s1057 = sand.u32 %s171, 1
        %s1058 = sand.u32 %s171, 1
        %s1059 = smul.addr %s1058, 64
        %s1060 = scalar_lea.vmem [#allocation4], %s1059
        // Predicated region
        $region127: #{hgcn_layer.5} parent=117 // pred_check
          %p1061 = pneg %p181
        $region128: #{hgcn_layer.5} parent=117 // pred_check_branch
          %1063 = sbr.rel (%p1061) target = $region130
        $region129: #{hgcn_layer.5} parent=117 // pred_region
          %s1064 = smul.u32 4, %s17
          %s1065 = smul.addr %s1064, 8
          %s1066 = scalar_lea.vmem %s6, %s1065
          // Predicated region
          $region131: #{hgcn_layer.5} parent=129 // pred_check
            _
          $region132: #{hgcn_layer.5} parent=129 // pred_check_branch
            %1068 = sbr.rel (0) target = $region134
          $region133: #{hgcn_layer.5} parent=129 // pred_region
            // Predicated region
            $region135: #{hgcn_layer.5} parent=133 // pred_check
              _
            $region136: #{hgcn_layer.5} parent=133 // pred_check_branch
              %1070 = sbr.rel (0) target = $region138
            $region137: #{hgcn_layer.5} parent=133 // pred_region
              // Predicated region
              $region150: #{hgcn_layer.5} parent=137 // pred_check
                _
              $region151: #{hgcn_layer.5} parent=137 // pred_check_branch
                %1100 = sbr.rel (0) target = $region153
              $region152: #{hgcn_layer.5} parent=137 // pred_region
                loop: start=0, step=1, limit=1
                $region154: #{hgcn_layer.5} parent=152 // loop_pre_header
                  _
                $region155: #{hgcn_layer.5} parent=152 // loop_header
                  %s1102 = sphi 0, %s1106
                  %p1103 = scmp.ge.s32.totalorder %s1102, 1
                  %s1107 = sphi %s1060, %s1060
                  %s1108 = sphi %s1066, %s1066
                $region156: #{hgcn_layer.5} parent=152 // loop_header_branch
                  %1105 = sbr.rel (%p1103) target = $region160
                $region157: #{hgcn_layer.5} parent=152 // loop_body
                  %v1109 = vld [vmem:[%s1107] sm:$0xff]
                  %1110 = vst [vmem:[%s1108] sm:$0xff] %v1109
                  %v1111 = vld [vmem:[%s1107 + $0x8] sm:$0xff]
                  %1112 = vst [vmem:[%s1108 + $0x8] sm:$0xff] %v1111
                  %v1113 = vld [vmem:[%s1107 + $0x10] sm:$0xff]
                  %1114 = vst [vmem:[%s1108 + $0x10] sm:$0xff] %v1113
                  %v1115 = vld [vmem:[%s1107 + $0x18] sm:$0xff]
                  %1116 = vst [vmem:[%s1108 + $0x18] sm:$0xff] %v1115
                  %v1117 = vld [vmem:[%s1107 + $0x20] sm:$0xff]
                  %1118 = vst [vmem:[%s1108 + $0x80] sm:$0xff] %v1117
                  %v1119 = vld [vmem:[%s1107 + $0x28] sm:$0xff]
                  %1120 = vst [vmem:[%s1108 + $0x88] sm:$0xff] %v1119
                  %v1121 = vld [vmem:[%s1107 + $0x30] sm:$0xff]
                  %1122 = vst [vmem:[%s1108 + $0x90] sm:$0xff] %v1121
                  %v1123 = vld [vmem:[%s1107 + $0x38] sm:$0xff]
                  %1124 = vst [vmem:[%s1108 + $0x98] sm:$0xff] %v1123
                $region158: #{hgcn_layer.5} parent=152 // loop_footer
                  %s1106 = sadd.s32 1, %s1102
                $region159: #{hgcn_layer.5} parent=152 // loop_footer_branch
                  %1101 = sbr.rel target = $region155
                $region160: #{hgcn_layer.5} parent=152 // loop_exit
                  _
              $region153: #{hgcn_layer.5} parent=137 // pred_fallthru
                _
              // Predicated region
              $region161: #{hgcn_layer.5} parent=137 // pred_check
                _
              $region162: #{hgcn_layer.5} parent=137 // pred_check_branch
                %1126 = sbr.rel target = $region164
              $region163: #{hgcn_layer.5} parent=137 // pred_region
                _
              $region164: #{hgcn_layer.5} parent=137 // pred_fallthru
                _
            $region138: #{hgcn_layer.5} parent=133 // pred_fallthru
              _
            // Predicated region
            $region139: #{hgcn_layer.5} parent=133 // pred_check
              _
            $region140: #{hgcn_layer.5} parent=133 // pred_check_branch
              %1072 = sbr.rel target = $region142
            $region141: #{hgcn_layer.5} parent=133 // pred_region
              %s1074 = ssub.s32 256, 1
              loop: start=0, step=1, limit=1
              $region143: #{hgcn_layer.5} parent=141 // loop_pre_header
                _
              $region144: #{hgcn_layer.5} parent=141 // loop_header
                %s1076 = sphi 0, %s1080
                %p1077 = scmp.ge.s32.totalorder %s1076, 1
                %s1081 = sphi %s1060, %s1060
                %s1082 = sphi %s1066, %s1066
              $region145: #{hgcn_layer.5} parent=141 // loop_header_branch
                %1079 = sbr.rel (%p1077) target = $region149
              $region146: #{hgcn_layer.5} parent=141 // loop_body
                %v1083 = vld [vmem:[%s1081] sm:%s1074]
                %1084 = vst [vmem:[%s1082] sm:%s1074] %v1083
                %v1085 = vld [vmem:[%s1081 + $0x8] sm:%s1074]
                %1086 = vst [vmem:[%s1082 + $0x8] sm:%s1074] %v1085
                %v1087 = vld [vmem:[%s1081 + $0x10] sm:%s1074]
                %1088 = vst [vmem:[%s1082 + $0x10] sm:%s1074] %v1087
                %v1089 = vld [vmem:[%s1081 + $0x18] sm:%s1074]
                %1090 = vst [vmem:[%s1082 + $0x18] sm:%s1074] %v1089
                %v1091 = vld [vmem:[%s1081 + $0x20] sm:%s1074]
                %1092 = vst [vmem:[%s1082 + $0x80] sm:%s1074] %v1091
                %v1093 = vld [vmem:[%s1081 + $0x28] sm:%s1074]
                %1094 = vst [vmem:[%s1082 + $0x88] sm:%s1074] %v1093
                %v1095 = vld [vmem:[%s1081 + $0x30] sm:%s1074]
                %1096 = vst [vmem:[%s1082 + $0x90] sm:%s1074] %v1095
                %v1097 = vld [vmem:[%s1081 + $0x38] sm:%s1074]
                %1098 = vst [vmem:[%s1082 + $0x98] sm:%s1074] %v1097
              $region147: #{hgcn_layer.5} parent=141 // loop_footer
                %s1080 = sadd.s32 1, %s1076
              $region148: #{hgcn_layer.5} parent=141 // loop_footer_branch
                %1075 = sbr.rel target = $region144
              $region149: #{hgcn_layer.5} parent=141 // loop_exit
                _
            $region142: #{hgcn_layer.5} parent=133 // pred_fallthru
              _
          $region134: #{hgcn_layer.5} parent=129 // pred_fallthru
            _
          %1127 = vnop
        $region130: #{hgcn_layer.5} parent=117 // pred_fallthru
          _
      $region118: #{hgcn_layer.5} parent=5 // pred_fallthru
        _
      %p1128 = scmp.le.s32.totalorder 2, %s12
      // Predicated region
      $region165: #{hgcn_layer.5} parent=5 // pred_check
        %p1129 = pneg %p1128
      $region166: #{hgcn_layer.5} parent=5 // pred_check_branch
        %1131 = sbr.rel (%p1129) target = $region168
      $region167: #{hgcn_layer.5} parent=5 // pred_region
        %s1132 = ssub.s32 %s12, 2
        // Predicated region
        $region169: #{hgcn_layer.5} parent=167 // pred_check
          %p1133 = pneg %p187
        $region170: #{hgcn_layer.5} parent=167 // pred_check_branch
          %1135 = sbr.rel (%p1133) target = $region172
        $region171: #{hgcn_layer.5} parent=167 // pred_region
          %s1136 = sand.u32 %s172, 1
          %s1137 = sand.u32 %s172, 1
          %s1138 = smul.addr %s1137, 64
          %s1139 = scalar_lea.vmem [#allocation4], %s1138
        $region172: #{hgcn_layer.5} parent=167 // pred_fallthru
          _
      $region168: #{hgcn_layer.5} parent=5 // pred_fallthru
        _
    $region6: #{hgcn_layer.5} parent=1 // loop_footer
      %s16 = sadd.s32 1, %s12
    $region7: #{hgcn_layer.5} parent=1 // loop_footer_branch
      %11 = sbr.rel target = $region3
    $region8: #{hgcn_layer.5} parent=1 // loop_exit
      _

// kernel: hgcn_layer.3
$region0: #{hgcn_layer.3}
  #allocation0 [shape = 'u32[]', space=smem, size = 0x4, offset = 0x4, fixed_abs, tag = 'smem constant byte address 0x4 - core index']
  #allocation1 [shape = 'u32[72,128]{1,0:T(1,128)}', space=vmem, size = 0x9000, scoped, tag = 'internal scratch']
  %s0 = inlined_call_operand.vmem [shape: bf16[2,128,32], index: 0, kind: input, shape index: {}, may-alias: {0,2}]
  %s1 = inlined_call_operand.vmem [shape: bf16[2,128,128], index: 1, kind: input, shape index: {}]
  %s2 = inlined_call_operand.vmem [shape: bf16[2,128,32], index: 2, kind: input, shape index: {}, may-alias: {0,2}]
  %s3 = inlined_call_operand.vmem [shape: bf16[32,32], index: 3, kind: input, shape index: {}]
  %s4 = inlined_call_operand.vmem [shape: f32[128,1], index: 4, kind: input, shape index: {}]
  %s5 = inlined_call_operand.vmem [shape: f32[128,1], index: 5, kind: input, shape index: {}]
  %s6 = inlined_call_operand.vmem [shape: bf16[2,128,32], index: 6, kind: output, shape index: {}]
  %s7 = sld [smem:[#allocation0]]
  $region176: #{hgcn_layer.3} parent=0
    _
  %s9 = ssub.s32 1, %s7
  %s10 = scalar_select 0, %s9, %s7
  $region1: #{hgcn_layer.3} parent=0
    #allocation2 [shape = 'u8[32768]{0}', space=vmem, size = 0x8000, scoped, tag = 'input window, operand 1']
    #allocation3 [shape = 'u8[32768]{0}', space=vmem, size = 0x8000, scoped, tag = 'input window, operand 2']
    #allocation4 [shape = 'u8[32768]{0}', space=vmem, size = 0x8000, scoped, tag = 'output window, operand 0']
    loop: start=0, step=1, limit=6
    $region2: #{hgcn_layer.3} parent=1 // loop_pre_header
      _
    $region3: #{hgcn_layer.3} parent=1 // loop_header
      %s12 = sphi 0, %s16
      %p13 = scmp.ge.s32.totalorder %s12, 6
      %s20 = sphi 0, %s20
      %s22 = sphi 0, %s20
      %s23 = sphi 0, %s22
      %s37 = sphi 0, %s23
      %s43 = sphi 0, %s45
      %s46 = sphi 0, %s43
      %s47 = sphi 0, %s46
      %s63 = sphi 0, %s47
      %s69 = sphi 0, %s71
      %s72 = sphi 0, %s69
      %s73 = sphi 0, %s72
      %s89 = sphi 0, %s73
      %s93 = sphi 0, %s93
      %s95 = sphi 0, %s93
      %s96 = sphi 0, %s95
      %s110 = sphi 0, %s96
      %s116 = sphi 0, %s118
      %s119 = sphi 0, %s116
      %s120 = sphi 0, %s119
      %s136 = sphi 0, %s120
      %s142 = sphi 0, %s144
      %s145 = sphi 0, %s142
      %s146 = sphi 0, %s145
      %s162 = sphi 0, %s146
      %s168 = sphi 0, %s170
      %s171 = sphi 0, %s168
      %s172 = sphi 0, %s171
      %s188 = sphi 0, %s172
    $region4: #{hgcn_layer.3} parent=1 // loop_header_branch
      %15 = sbr.rel (%p13) target = $region8
    $region5: #{hgcn_layer.3} parent=1 // loop_body
      %s17 = ssub.s32 %s12, 1
      %s18 = ssub.s32 %s12, 2
      %s19 = sadd.s32 %s12, 1
      %s21 = sadd.s32 %s20, 1
      %p24 = scmp.eq.s32.totalorder %s12, 3
      %p25 = scmp.ne.s32.totalorder %s20, %s22
      %p26 = scmp.eq.s32.totalorder %s12, 0
      %p27 = por %p25, %p26
      %p28 = scmp.ne.s32.totalorder %s20, %s22
      %p29 = scmp.eq.s32.totalorder %s17, 3
      %p30 = por %p28, %p29
      %p31 = scmp.ne.s32.totalorder %s22, %s23
      %p32 = scmp.eq.s32.totalorder %s17, 0
      %p33 = por %p31, %p32
      %p34 = scmp.ne.s32.totalorder %s22, %s23
      %p35 = scmp.eq.s32.totalorder %s18, 3
      %p36 = por %p34, %p35
      %p38 = scmp.ne.s32.totalorder %s23, %s37
      %p39 = scmp.eq.s32.totalorder %s18, 0
      %p40 = por %p38, %p39
      %s41 = ssub.s32 %s12, %s19
      %p42 = scmp.eq.s32.totalorder %s41, 0
      %s44 = sadd.s32 %s43, 1
      %s45 = scalar_select %p42, %s43, %s44
      %p48 = pneg %p42
      %p49 = scmp.eq.s32.totalorder %s12, 3
      %p50 = por %p48, %p49
      %p51 = scmp.ne.s32.totalorder %s43, %s46
      %p52 = scmp.eq.s32.totalorder %s12, 0
      %p53 = por %p51, %p52
      %p54 = scmp.ne.s32.totalorder %s43, %s46
      %p55 = scmp.eq.s32.totalorder %s17, 3
      %p56 = por %p54, %p55
      %p57 = scmp.ne.s32.totalorder %s46, %s47
      %p58 = scmp.eq.s32.totalorder %s17, 0
      %p59 = por %p57, %p58
      %p60 = scmp.ne.s32.totalorder %s46, %s47
      %p61 = scmp.eq.s32.totalorder %s18, 3
      %p62 = por %p60, %p61
      %p64 = scmp.ne.s32.totalorder %s47, %s63
      %p65 = scmp.eq.s32.totalorder %s18, 0
      %p66 = por %p64, %p65
      %s67 = ssub.s32 %s12, %s19
      %p68 = scmp.eq.s32.totalorder %s67, 0
      %s70 = sadd.s32 %s69, 1
      %s71 = scalar_select %p68, %s69, %s70
      %p74 = pneg %p68
      %p75 = scmp.eq.s32.totalorder %s12, 3
      %p76 = por %p74, %p75
      %p77 = scmp.ne.s32.totalorder %s69, %s72
      %p78 = scmp.eq.s32.totalorder %s12, 0
      %p79 = por %p77, %p78
      %p80 = scmp.ne.s32.totalorder %s69, %s72
      %p81 = scmp.eq.s32.totalorder %s17, 3
      %p82 = por %p80, %p81
      %p83 = scmp.ne.s32.totalorder %s72, %s73
      %p84 = scmp.eq.s32.totalorder %s17, 0
      %p85 = por %p83, %p84
      %p86 = scmp.ne.s32.totalorder %s72, %s73
      %p87 = scmp.eq.s32.totalorder %s18, 3
      %p88 = por %p86, %p87
      %p90 = scmp.ne.s32.totalorder %s73, %s89
      %p91 = scmp.eq.s32.totalorder %s18, 0
      %p92 = por %p90, %p91
      %s94 = sadd.s32 %s93, 1
      %p97 = scmp.eq.s32.totalorder %s12, 3
      %p98 = scmp.ne.s32.totalorder %s93, %s95
      %p99 = scmp.eq.s32.totalorder %s12, 0
      %p100 = por %p98, %p99
      %p101 = scmp.ne.s32.totalorder %s93, %s95
      %p102 = scmp.eq.s32.totalorder %s17, 3
      %p103 = por %p101, %p102
      %p104 = scmp.ne.s32.totalorder %s95, %s96
      %p105 = scmp.eq.s32.totalorder %s17, 0
      %p106 = por %p104, %p105
      %p107 = scmp.ne.s32.totalorder %s95, %s96
      %p108 = scmp.eq.s32.totalorder %s18, 3
      %p109 = por %p107, %p108
      %p111 = scmp.ne.s32.totalorder %s96, %s110
      %p112 = scmp.eq.s32.totalorder %s18, 0
      %p113 = por %p111, %p112
      %s114 = ssub.s32 %s12, %s19
      %p115 = scmp.eq.s32.totalorder %s114, 0
      %s117 = sadd.s32 %s116, 1
      %s118 = scalar_select %p115, %s116, %s117
      %p121 = pneg %p115
      %p122 = scmp.eq.s32.totalorder %s12, 3
      %p123 = por %p121, %p122
      %p124 = scmp.ne.s32.totalorder %s116, %s119
      %p125 = scmp.eq.s32.totalorder %s12, 0
      %p126 = por %p124, %p125
      %p127 = scmp.ne.s32.totalorder %s116, %s119
      %p128 = scmp.eq.s32.totalorder %s17, 3
      %p129 = por %p127, %p128
      %p130 = scmp.ne.s32.totalorder %s119, %s120
      %p131 = scmp.eq.s32.totalorder %s17, 0
      %p132 = por %p130, %p131
      %p133 = scmp.ne.s32.totalorder %s119, %s120
      %p134 = scmp.eq.s32.totalorder %s18, 3
      %p135 = por %p133, %p134
      %p137 = scmp.ne.s32.totalorder %s120, %s136
      %p138 = scmp.eq.s32.totalorder %s18, 0
      %p139 = por %p137, %p138
      %s140 = ssub.s32 %s12, %s19
      %p141 = scmp.eq.s32.totalorder %s140, 0
      %s143 = sadd.s32 %s142, 1
      %s144 = scalar_select %p141, %s142, %s143
      %p147 = pneg %p141
      %p148 = scmp.eq.s32.totalorder %s12, 3
      %p149 = por %p147, %p148
      %p150 = scmp.ne.s32.totalorder %s142, %s145
      %p151 = scmp.eq.s32.totalorder %s12, 0
      %p152 = por %p150, %p151
      %p153 = scmp.ne.s32.totalorder %s142, %s145
      %p154 = scmp.eq.s32.totalorder %s17, 3
      %p155 = por %p153, %p154
      %p156 = scmp.ne.s32.totalorder %s145, %s146
      %p157 = scmp.eq.s32.totalorder %s17, 0
      %p158 = por %p156, %p157
      %p159 = scmp.ne.s32.totalorder %s145, %s146
      %p160 = scmp.eq.s32.totalorder %s18, 3
      %p161 = por %p159, %p160
      %p163 = scmp.ne.s32.totalorder %s146, %s162
      %p164 = scmp.eq.s32.totalorder %s18, 0
      %p165 = por %p163, %p164
      %s166 = ssub.s32 %s12, %s19
      %p167 = scmp.eq.s32.totalorder %s166, 0
      %s169 = sadd.s32 %s168, 1
      %s170 = scalar_select %p167, %s168, %s169
      %p173 = pneg %p167
      %p174 = scmp.eq.s32.totalorder %s12, 3
      %p175 = por %p173, %p174
      %p176 = scmp.ne.s32.totalorder %s168, %s171
      %p177 = scmp.eq.s32.totalorder %s12, 0
      %p178 = por %p176, %p177
      %p179 = scmp.ne.s32.totalorder %s168, %s171
      %p180 = scmp.eq.s32.totalorder %s17, 3
      %p181 = por %p179, %p180
      %p182 = scmp.ne.s32.totalorder %s171, %s172
      %p183 = scmp.eq.s32.totalorder %s17, 0
      %p184 = por %p182, %p183
      %p185 = scmp.ne.s32.totalorder %s171, %s172
      %p186 = scmp.eq.s32.totalorder %s18, 3
      %p187 = por %p185, %p186
      %p189 = scmp.ne.s32.totalorder %s172, %s188
      %p190 = scmp.eq.s32.totalorder %s18, 0
      %p191 = por %p189, %p190
      %p192 = scmp.le.s32.totalorder 1, %s12
      %p193 = scmp.lt.s32.totalorder %s12, 5
      %p194 = pnand %p192, %p193
      %p195 = pneg %p194
      // Predicated region
      $region9: #{hgcn_layer.3} parent=5 // pred_check
        _
      $region10: #{hgcn_layer.3} parent=5 // pred_check_branch
        %197 = sbr.rel (%p194) target = $region12
      $region11: #{hgcn_layer.3} parent=5 // pred_region
        %s198 = ssub.s32 %s12, 1
        // Predicated region
        $region13: #{hgcn_layer.3} parent=11 // pred_check
          %p199 = pneg %p33
        $region14: #{hgcn_layer.3} parent=11 // pred_check_branch
          %201 = sbr.rel (%p199) target = $region16
        $region15: #{hgcn_layer.3} parent=11 // pred_region
          _
        $region16: #{hgcn_layer.3} parent=11 // pred_fallthru
          _
        // Predicated region
        $region17: #{hgcn_layer.3} parent=11 // pred_check
          %p202 = pneg %p106
        $region18: #{hgcn_layer.3} parent=11 // pred_check_branch
          %204 = sbr.rel (%p202) target = $region20
        $region19: #{hgcn_layer.3} parent=11 // pred_region
          _
        $region20: #{hgcn_layer.3} parent=11 // pred_fallthru
          _
      $region12: #{hgcn_layer.3} parent=5 // pred_fallthru
        _
      %p205 = scmp.lt.s32.totalorder %s12, 4
      // Predicated region
      $region21: #{hgcn_layer.3} parent=5 // pred_check
        %p206 = pneg %p205
      $region22: #{hgcn_layer.3} parent=5 // pred_check_branch
        %208 = sbr.rel (%p206) target = $region24
      $region23: #{hgcn_layer.3} parent=5 // pred_region
        // Predicated region
        $region25: #{hgcn_layer.3} parent=23 // pred_check
          %p209 = pneg %p53
        $region26: #{hgcn_layer.3} parent=23 // pred_check_branch
          %211 = sbr.rel (%p209) target = $region28
        $region27: #{hgcn_layer.3} parent=23 // pred_region
          %s212 = sand.u32 %s43, 1
          %s213 = sand.u32 %s43, 1
          %s214 = smul.addr %s213, 32
          %s215 = scalar_lea.vmem [#allocation2], %s214
          %s216 = smul.u32 4, %s12
          %s217 = smul.addr %s216, 4
          %s218 = scalar_lea.vmem %s1, %s217
          // Predicated region
          $region29: #{hgcn_layer.3} parent=27 // pred_check
            _
          $region30: #{hgcn_layer.3} parent=27 // pred_check_branch
            %220 = sbr.rel (0) target = $region32
          $region31: #{hgcn_layer.3} parent=27 // pred_region
            // Predicated region
            $region33: #{hgcn_layer.3} parent=31 // pred_check
              _
            $region34: #{hgcn_layer.3} parent=31 // pred_check_branch
              %222 = sbr.rel target = $region36
            $region35: #{hgcn_layer.3} parent=31 // pred_region
              // Predicated region
              $region48: #{hgcn_layer.3} parent=35 // pred_check
                _
              $region49: #{hgcn_layer.3} parent=35 // pred_check_branch
                %252 = sbr.rel (0) target = $region51
              $region50: #{hgcn_layer.3} parent=35 // pred_region
                loop: start=0, step=1, limit=1
                $region52: #{hgcn_layer.3} parent=50 // loop_pre_header
                  _
                $region53: #{hgcn_layer.3} parent=50 // loop_header
                  %s254 = sphi 0, %s258
                  %p255 = scmp.ge.s32.totalorder %s254, 1
                  %s259 = sphi %s218, %s218
                  %s260 = sphi %s215, %s215
                $region54: #{hgcn_layer.3} parent=50 // loop_header_branch
                  %257 = sbr.rel (%p255) target = $region58
                $region55: #{hgcn_layer.3} parent=50 // loop_body
                  _
                $region56: #{hgcn_layer.3} parent=50 // loop_footer
                  %s258 = sadd.s32 1, %s254
                $region57: #{hgcn_layer.3} parent=50 // loop_footer_branch
                  %253 = sbr.rel target = $region53
                $region58: #{hgcn_layer.3} parent=50 // loop_exit
                  _
                %s262 = ssub.s32 16, 1
                loop: start=0, step=1, limit=1
                $region59: #{hgcn_layer.3} parent=50 // loop_pre_header
                  _
                $region60: #{hgcn_layer.3} parent=50 // loop_header
                  %s264 = sphi 0, %s268
                  %p265 = scmp.ge.s32.totalorder %s264, 1
                  %s269 = sphi %s218, %s218
                  %s270 = sphi %s215, %s215
                $region61: #{hgcn_layer.3} parent=50 // loop_header_branch
                  %267 = sbr.rel (%p265) target = $region65
                $region62: #{hgcn_layer.3} parent=50 // loop_body
                  %v271 = vld [vmem:[%s269] sm:%s262]
                  %272 = vst [vmem:[%s270] sm:%s262] %v271
                  %v273 = vld [vmem:[%s269 + $0x4] sm:%s262]
                  %274 = vst [vmem:[%s270 + $0x4] sm:%s262] %v273
                  %v275 = vld [vmem:[%s269 + $0x8] sm:%s262]
                  %276 = vst [vmem:[%s270 + $0x8] sm:%s262] %v275
                  %v277 = vld [vmem:[%s269 + $0xc] sm:%s262]
                  %278 = vst [vmem:[%s270 + $0xc] sm:%s262] %v277
                  %v279 = vld [vmem:[%s269 + $0x40] sm:%s262]
                  %280 = vst [vmem:[%s270 + $0x10] sm:%s262] %v279
                  %v281 = vld [vmem:[%s269 + $0x44] sm:%s262]
                  %282 = vst [vmem:[%s270 + $0x14] sm:%s262] %v281
                  %v283 = vld [vmem:[%s269 + $0x48] sm:%s262]
                  %284 = vst [vmem:[%s270 + $0x18] sm:%s262] %v283
                  %v285 = vld [vmem:[%s269 + $0x4c] sm:%s262]
                  %286 = vst [vmem:[%s270 + $0x1c] sm:%s262] %v285
                $region63: #{hgcn_layer.3} parent=50 // loop_footer
                  %s268 = sadd.s32 1, %s264
                $region64: #{hgcn_layer.3} parent=50 // loop_footer_branch
                  %263 = sbr.rel target = $region60
                $region65: #{hgcn_layer.3} parent=50 // loop_exit
                  _
              $region51: #{hgcn_layer.3} parent=35 // pred_fallthru
                _
            $region36: #{hgcn_layer.3} parent=31 // pred_fallthru
              _
            // Predicated region
            $region37: #{hgcn_layer.3} parent=31 // pred_check
              _
            $region38: #{hgcn_layer.3} parent=31 // pred_check_branch
              %224 = sbr.rel (0) target = $region40
            $region39: #{hgcn_layer.3} parent=31 // pred_region
              %s226 = ssub.s32 16, 1
              loop: start=0, step=1, limit=1
              $region41: #{hgcn_layer.3} parent=39 // loop_pre_header
                _
              $region42: #{hgcn_layer.3} parent=39 // loop_header
                %s228 = sphi 0, %s232
                %p229 = scmp.ge.s32.totalorder %s228, 1
                %s233 = sphi %s218, %s218
                %s234 = sphi %s215, %s215
              $region43: #{hgcn_layer.3} parent=39 // loop_header_branch
                %231 = sbr.rel (%p229) target = $region47
              $region44: #{hgcn_layer.3} parent=39 // loop_body
                %v235 = vld [vmem:[%s233] sm:%s226]
                %236 = vst [vmem:[%s234] sm:%s226] %v235
                %v237 = vld [vmem:[%s233 + $0x4] sm:%s226]
                %238 = vst [vmem:[%s234 + $0x4] sm:%s226] %v237
                %v239 = vld [vmem:[%s233 + $0x8] sm:%s226]
                %240 = vst [vmem:[%s234 + $0x8] sm:%s226] %v239
                %v241 = vld [vmem:[%s233 + $0xc] sm:%s226]
                %242 = vst [vmem:[%s234 + $0xc] sm:%s226] %v241
                %v243 = vld [vmem:[%s233 + $0x40] sm:%s226]
                %244 = vst [vmem:[%s234 + $0x10] sm:%s226] %v243
                %v245 = vld [vmem:[%s233 + $0x44] sm:%s226]
                %246 = vst [vmem:[%s234 + $0x14] sm:%s226] %v245
                %v247 = vld [vmem:[%s233 + $0x48] sm:%s226]
                %248 = vst [vmem:[%s234 + $0x18] sm:%s226] %v247
                %v249 = vld [vmem:[%s233 + $0x4c] sm:%s226]
                %250 = vst [vmem:[%s234 + $0x1c] sm:%s226] %v249
              $region45: #{hgcn_layer.3} parent=39 // loop_footer
                %s232 = sadd.s32 1, %s228
              $region46: #{hgcn_layer.3} parent=39 // loop_footer_branch
                %227 = sbr.rel target = $region42
              $region47: #{hgcn_layer.3} parent=39 // loop_exit
                _
            $region40: #{hgcn_layer.3} parent=31 // pred_fallthru
              _
          $region32: #{hgcn_layer.3} parent=27 // pred_fallthru
            _
          %287 = vnop
        $region28: #{hgcn_layer.3} parent=23 // pred_fallthru
          _
        // Predicated region
        $region66: #{hgcn_layer.3} parent=23 // pred_check
          %p288 = pneg %p79
        $region67: #{hgcn_layer.3} parent=23 // pred_check_branch
          %290 = sbr.rel (%p288) target = $region69
        $region68: #{hgcn_layer.3} parent=23 // pred_region
          %s291 = sand.u32 %s69, 1
          %s292 = sand.u32 %s69, 1
          %s293 = smul.addr %s292, 32
          %s294 = scalar_lea.vmem [#allocation3], %s293
          %s295 = smul.u32 4, %s12
          %s296 = smul.addr %s295, 4
          %s297 = scalar_lea.vmem %s2, %s296
          // Predicated region
          $region70: #{hgcn_layer.3} parent=68 // pred_check
            _
          $region71: #{hgcn_layer.3} parent=68 // pred_check_branch
            %299 = sbr.rel (0) target = $region73
          $region72: #{hgcn_layer.3} parent=68 // pred_region
            // Predicated region
            $region74: #{hgcn_layer.3} parent=72 // pred_check
              _
            $region75: #{hgcn_layer.3} parent=72 // pred_check_branch
              %301 = sbr.rel target = $region77
            $region76: #{hgcn_layer.3} parent=72 // pred_region
              // Predicated region
              $region89: #{hgcn_layer.3} parent=76 // pred_check
                _
              $region90: #{hgcn_layer.3} parent=76 // pred_check_branch
                %331 = sbr.rel (0) target = $region92
              $region91: #{hgcn_layer.3} parent=76 // pred_region
                loop: start=0, step=1, limit=1
                $region93: #{hgcn_layer.3} parent=91 // loop_pre_header
                  _
                $region94: #{hgcn_layer.3} parent=91 // loop_header
                  %s333 = sphi 0, %s337
                  %p334 = scmp.ge.s32.totalorder %s333, 1
                  %s338 = sphi %s297, %s297
                  %s339 = sphi %s294, %s294
                $region95: #{hgcn_layer.3} parent=91 // loop_header_branch
                  %336 = sbr.rel (%p334) target = $region99
                $region96: #{hgcn_layer.3} parent=91 // loop_body
                  _
                $region97: #{hgcn_layer.3} parent=91 // loop_footer
                  %s337 = sadd.s32 1, %s333
                $region98: #{hgcn_layer.3} parent=91 // loop_footer_branch
                  %332 = sbr.rel target = $region94
                $region99: #{hgcn_layer.3} parent=91 // loop_exit
                  _
                %s341 = ssub.s32 16, 1
                loop: start=0, step=1, limit=1
                $region100: #{hgcn_layer.3} parent=91 // loop_pre_header
                  _
                $region101: #{hgcn_layer.3} parent=91 // loop_header
                  %s343 = sphi 0, %s347
                  %p344 = scmp.ge.s32.totalorder %s343, 1
                  %s348 = sphi %s297, %s297
                  %s349 = sphi %s294, %s294
                $region102: #{hgcn_layer.3} parent=91 // loop_header_branch
                  %346 = sbr.rel (%p344) target = $region106
                $region103: #{hgcn_layer.3} parent=91 // loop_body
                  %v350 = vld [vmem:[%s348] sm:%s341]
                  %351 = vst [vmem:[%s349] sm:%s341] %v350
                  %v352 = vld [vmem:[%s348 + $0x4] sm:%s341]
                  %353 = vst [vmem:[%s349 + $0x4] sm:%s341] %v352
                  %v354 = vld [vmem:[%s348 + $0x8] sm:%s341]
                  %355 = vst [vmem:[%s349 + $0x8] sm:%s341] %v354
                  %v356 = vld [vmem:[%s348 + $0xc] sm:%s341]
                  %357 = vst [vmem:[%s349 + $0xc] sm:%s341] %v356
                  %v358 = vld [vmem:[%s348 + $0x40] sm:%s341]
                  %359 = vst [vmem:[%s349 + $0x10] sm:%s341] %v358
                  %v360 = vld [vmem:[%s348 + $0x44] sm:%s341]
                  %361 = vst [vmem:[%s349 + $0x14] sm:%s341] %v360
                  %v362 = vld [vmem:[%s348 + $0x48] sm:%s341]
                  %363 = vst [vmem:[%s349 + $0x18] sm:%s341] %v362
                  %v364 = vld [vmem:[%s348 + $0x4c] sm:%s341]
                  %365 = vst [vmem:[%s349 + $0x1c] sm:%s341] %v364
                $region104: #{hgcn_layer.3} parent=91 // loop_footer
                  %s347 = sadd.s32 1, %s343
                $region105: #{hgcn_layer.3} parent=91 // loop_footer_branch
                  %342 = sbr.rel target = $region101
                $region106: #{hgcn_layer.3} parent=91 // loop_exit
                  _
              $region92: #{hgcn_layer.3} parent=76 // pred_fallthru
                _
            $region77: #{hgcn_layer.3} parent=72 // pred_fallthru
              _
            // Predicated region
            $region78: #{hgcn_layer.3} parent=72 // pred_check
              _
            $region79: #{hgcn_layer.3} parent=72 // pred_check_branch
              %303 = sbr.rel (0) target = $region81
            $region80: #{hgcn_layer.3} parent=72 // pred_region
              %s305 = ssub.s32 16, 1
              loop: start=0, step=1, limit=1
              $region82: #{hgcn_layer.3} parent=80 // loop_pre_header
                _
              $region83: #{hgcn_layer.3} parent=80 // loop_header
                %s307 = sphi 0, %s311
                %p308 = scmp.ge.s32.totalorder %s307, 1
                %s312 = sphi %s297, %s297
                %s313 = sphi %s294, %s294
              $region84: #{hgcn_layer.3} parent=80 // loop_header_branch
                %310 = sbr.rel (%p308) target = $region88
              $region85: #{hgcn_layer.3} parent=80 // loop_body
                %v314 = vld [vmem:[%s312] sm:%s305]
                %315 = vst [vmem:[%s313] sm:%s305] %v314
                %v316 = vld [vmem:[%s312 + $0x4] sm:%s305]
                %317 = vst [vmem:[%s313 + $0x4] sm:%s305] %v316
                %v318 = vld [vmem:[%s312 + $0x8] sm:%s305]
                %319 = vst [vmem:[%s313 + $0x8] sm:%s305] %v318
                %v320 = vld [vmem:[%s312 + $0xc] sm:%s305]
                %321 = vst [vmem:[%s313 + $0xc] sm:%s305] %v320
                %v322 = vld [vmem:[%s312 + $0x40] sm:%s305]
                %323 = vst [vmem:[%s313 + $0x10] sm:%s305] %v322
                %v324 = vld [vmem:[%s312 + $0x44] sm:%s305]
                %325 = vst [vmem:[%s313 + $0x14] sm:%s305] %v324
                %v326 = vld [vmem:[%s312 + $0x48] sm:%s305]
                %327 = vst [vmem:[%s313 + $0x18] sm:%s305] %v326
                %v328 = vld [vmem:[%s312 + $0x4c] sm:%s305]
                %329 = vst [vmem:[%s313 + $0x1c] sm:%s305] %v328
              $region86: #{hgcn_layer.3} parent=80 // loop_footer
                %s311 = sadd.s32 1, %s307
              $region87: #{hgcn_layer.3} parent=80 // loop_footer_branch
                %306 = sbr.rel target = $region83
              $region88: #{hgcn_layer.3} parent=80 // loop_exit
                _
            $region81: #{hgcn_layer.3} parent=72 // pred_fallthru
              _
          $region73: #{hgcn_layer.3} parent=68 // pred_fallthru
            _
          %366 = vnop
        $region69: #{hgcn_layer.3} parent=23 // pred_fallthru
          _
        // Predicated region
        $region107: #{hgcn_layer.3} parent=23 // pred_check
          %p367 = pneg %p126
        $region108: #{hgcn_layer.3} parent=23 // pred_check_branch
          %369 = sbr.rel (%p367) target = $region110
        $region109: #{hgcn_layer.3} parent=23 // pred_region
          %s370 = smul.u32 4, %s12
          %p371 = scmp.lt.s32.totalorder %s370, 15
          %s372 = scalar_select %p371, %s370, 15
          %s373 = smul.addr %s372, 8
          %s374 = scalar_lea.vmem %s4, %s373
          %s375 = smul.u32 4, %s12
        $region110: #{hgcn_layer.3} parent=23 // pred_fallthru
          _
        // Predicated region
        $region111: #{hgcn_layer.3} parent=23 // pred_check
          %p376 = pneg %p152
        $region112: #{hgcn_layer.3} parent=23 // pred_check_branch
          %378 = sbr.rel (%p376) target = $region114
        $region113: #{hgcn_layer.3} parent=23 // pred_region
          %s379 = smul.u32 4, %s12
          %p380 = scmp.lt.s32.totalorder %s379, 15
          %s381 = scalar_select %p380, %s379, 15
          %s382 = smul.addr %s381, 8
          %s383 = scalar_lea.vmem %s5, %s382
          %s384 = smul.u32 4, %s12
        $region114: #{hgcn_layer.3} parent=23 // pred_fallthru
          _
      $region24: #{hgcn_layer.3} parent=5 // pred_fallthru
        _
      %p385 = scmp.le.s32.totalorder 1, %s12
      %p386 = scmp.lt.s32.totalorder %s12, 5
      %p387 = pnand %p385, %p386
      %p388 = pneg %p387
      // Predicated region
      $region115: #{hgcn_layer.3} parent=5 // pred_check
        _
      $region116: #{hgcn_layer.3} parent=5 // pred_check_branch
        %390 = sbr.rel (%p387) target = $region118
      $region117: #{hgcn_layer.3} parent=5 // pred_region
        %s391 = ssub.s32 %s12, 1
        %s392 = sand.u32 %s46, 1
        %s393 = sand.u32 %s46, 1
        %s394 = smul.addr %s393, 32
        %s395 = scalar_lea.vmem [#allocation2], %s394
        // Predicated region
        $region119: #{hgcn_layer.3} parent=117 // pred_check
          %p396 = pneg %p59
        $region120: #{hgcn_layer.3} parent=117 // pred_check_branch
          %398 = sbr.rel (%p396) target = $region122
        $region121: #{hgcn_layer.3} parent=117 // pred_region
          _
        $region122: #{hgcn_layer.3} parent=117 // pred_fallthru
          _
        %s399 = sand.u32 %s72, 1
        %s400 = sand.u32 %s72, 1
        %s401 = smul.addr %s400, 32
        %s402 = scalar_lea.vmem [#allocation3], %s401
        // Predicated region
        $region123: #{hgcn_layer.3} parent=117 // pred_check
          %p403 = pneg %p85
        $region124: #{hgcn_layer.3} parent=117 // pred_check_branch
          %405 = sbr.rel (%p403) target = $region126
        $region125: #{hgcn_layer.3} parent=117 // pred_region
          _
        $region126: #{hgcn_layer.3} parent=117 // pred_fallthru
          _
        %p406 = pneg %p33
        %p407 = pneg %p30
        %s408 = sand.u32 %s46, 1
        %s409 = sand.u32 %s46, 1
        %s410 = smul.addr %s409, 32
        %s411 = scalar_lea.vmem [#allocation2], %s410
        %p412 = pneg %p59
        %p413 = pneg %p56
        %s414 = sand.u32 %s72, 1
        %s415 = sand.u32 %s72, 1
        %s416 = smul.addr %s415, 32
        %s417 = scalar_lea.vmem [#allocation3], %s416
        %p418 = pneg %p85
        %p419 = pneg %p82
        %p420 = pneg %p106
        %p421 = pneg %p103
        %s422 = smul.u32 4, %s17
        %p423 = scmp.lt.s32.totalorder %s422, 15
        %s424 = scalar_select %p423, %s422, 15
        %s425 = smul.addr %s424, 8
        %s426 = scalar_lea.vmem %s4, %s425
        %p427 = pneg %p132
        %p428 = pneg %p129
        %s429 = smul.u32 4, %s17
        %p430 = scmp.lt.s32.totalorder %s429, 15
        %s431 = scalar_select %p430, %s429, 15
        %s432 = smul.addr %s431, 8
        %s433 = scalar_lea.vmem %s5, %s432
        %p434 = pneg %p158
        %p435 = pneg %p155
        %p436 = pneg %p184
        %p437 = pneg %p181
        %s438 = sand.u32 %s171, 1
        %s439 = sand.u32 %s171, 1
        %s440 = smul.addr %s439, 32
        %s441 = scalar_lea.vmem [#allocation4], %s440
        %s442 = smul.u32 4, %s17
        %s443 = smul.u32 4, %s17
        %s444 = smul.u32 4, %s17
        %p445 = scmp.lt.s32.totalorder %s444, 15
        %s446 = scalar_select %p445, %s444, 15
        %s447 = smul.addr %s446, 8
        %s448 = scalar_lea.vmem %s4, %s447
        %s449 = smul.u32 4, %s17
        %s450 = smul.u32 4, %s17
        %p451 = scmp.lt.s32.totalorder %s450, 15
        %s452 = scalar_select %p451, %s450, 15
        %s453 = smul.addr %s452, 8
        %s454 = scalar_lea.vmem %s5, %s453
        %s455 = smul.u32 4, %s17
        %s456 = smul.u32 4, %s17
        %v458 = vld [vmem:[%s0] sm:$0xf]
        %v459 = vld [vmem:[%s0 + $0x4] sm:$0xf]
        %v460 = vld [vmem:[%s0 + $0x8] sm:$0xf]
        %v461 = vld [vmem:[%s0 + $0xc] sm:$0xf]
        %v462 = vld [vmem:[%s0 + $0x10] sm:$0xf]
        %v463 = vld [vmem:[%s0 + $0x14] sm:$0xf]
        %v464 = vld [vmem:[%s0 + $0x18] sm:$0xf]
        %v465 = vld [vmem:[%s0 + $0x1c] sm:$0xf]
        %v466 = vld [vmem:[%s0 + $0x20] sm:$0xf]
        %v467 = vld [vmem:[%s0 + $0x24] sm:$0xf]
        %v468 = vld [vmem:[%s0 + $0x28] sm:$0xf]
        %v469 = vld [vmem:[%s0 + $0x2c] sm:$0xf]
        %v470 = vld [vmem:[%s0 + $0x30] sm:$0xf]
        %v471 = vld [vmem:[%s0 + $0x34] sm:$0xf]
        %v472 = vld [vmem:[%s0 + $0x38] sm:$0xf]
        %v473 = vld [vmem:[%s0 + $0x3c] sm:$0xf]
        %v474 = vld [vmem:[%s0 + $0x40] sm:$0xf]
        %v475 = vld [vmem:[%s0 + $0x44] sm:$0xf]
        %v476 = vld [vmem:[%s0 + $0x48] sm:$0xf]
        %v477 = vld [vmem:[%s0 + $0x4c] sm:$0xf]
        %v478 = vld [vmem:[%s0 + $0x50] sm:$0xf]
        %v479 = vld [vmem:[%s0 + $0x54] sm:$0xf]
        %v480 = vld [vmem:[%s0 + $0x58] sm:$0xf]
        %v481 = vld [vmem:[%s0 + $0x5c] sm:$0xf]
        %v482 = vld [vmem:[%s0 + $0x60] sm:$0xf]
        %v483 = vld [vmem:[%s0 + $0x64] sm:$0xf]
        %v484 = vld [vmem:[%s0 + $0x68] sm:$0xf]
        %v485 = vld [vmem:[%s0 + $0x6c] sm:$0xf]
        %v486 = vld [vmem:[%s0 + $0x70] sm:$0xf]
        %v487 = vld [vmem:[%s0 + $0x74] sm:$0xf]
        %v488 = vld [vmem:[%s0 + $0x78] sm:$0xf]
        %v489 = vld [vmem:[%s0 + $0x7c] sm:$0xf]
        %v490 = vld [vmem:[%s395] sm:$0xf]
        %v491 = vld [vmem:[%s395 + $0x4] sm:$0xf]
        %v492 = vld [vmem:[%s395 + $0x8] sm:$0xf]
        %v493 = vld [vmem:[%s395 + $0xc] sm:$0xf]
        %v494 = vld [vmem:[%s395 + $0x10] sm:$0xf]
        %v495 = vld [vmem:[%s395 + $0x14] sm:$0xf]
        %v496 = vld [vmem:[%s395 + $0x18] sm:$0xf]
        %v497 = vld [vmem:[%s395 + $0x1c] sm:$0xf]
        %v498 = vld [vmem:[%s3] sm:$0xf]
        %v499 = vld [vmem:[%s3 + $0x4] sm:$0xf]
        %v500 = vld [vmem:[%s3 + $0x8] sm:$0xf]
        %v501 = vld [vmem:[%s3 + $0xc] sm:$0xf]
        %v506 = vunpack.c.l.b16 %v490
        %v507 = vunpack.c.l.b16 %v491
        %v508 = vunpack.c.l.b16 %v492
        %v509 = vunpack.c.l.b16 %v493
        %v510 = vpack.c.b16 %v507, %v506
        %v511 = vpack.c.b16 %v509, %v508
        %v530 = vunpack.c.l.b16 %v458
        %v531 = vunpack.c.l.b16 %v459
        %v532 = vunpack.c.l.b16 %v460
        %v533 = vunpack.c.l.b16 %v461
        %v534 = vunpack.c.l.b16 %v462
        %v535 = vunpack.c.l.b16 %v463
        %v536 = vunpack.c.l.b16 %v464
        %v537 = vunpack.c.l.b16 %v465
        %v538 = vunpack.c.l.b16 %v466
        %v539 = vunpack.c.l.b16 %v467
        %v540 = vunpack.c.l.b16 %v468
        %v541 = vunpack.c.l.b16 %v469
        %v542 = vunpack.c.l.b16 %v470
        %v543 = vunpack.c.l.b16 %v471
        %v544 = vunpack.c.l.b16 %v472
        %v545 = vunpack.c.l.b16 %v473
        %v546 = vpack.c.b16 %v531, %v530
        %v547 = vpack.c.b16 %v533, %v532
        %v548 = vpack.c.b16 %v535, %v534
        %v549 = vpack.c.b16 %v537, %v536
        %v550 = vpack.c.b16 %v539, %v538
        %v551 = vpack.c.b16 %v541, %v540
        %v552 = vpack.c.b16 %v543, %v542
        %v553 = vpack.c.b16 %v545, %v544
        %562 = vmatpush.bf16.msra.mxu0 %v553
        %563 = vmatpush.bf16.msra.mxu0 %v552
        %564 = vmatpush.bf16.msra.mxu0 %v551
        %565 = vmatpush.bf16.msra.mxu0 %v550
        %566 = vmatpush.bf16.msra.mxu0 %v549
        %567 = vmatpush.bf16.msra.mxu0 %v548
        %568 = vmatpush.bf16.msra.mxu0 %v547
        %569 = vmatpush.bf16.msra.mxu0 %v546
        %570 = vmatmul.bf16.gmra.mxu0 %v510
        %v571 = vpop.f32.mrf.mxu0
        %v572 = vadd.f32 0.0, %v571
        %v573 = vpop.f32.mrf.mxu0
        %v574 = vadd.f32 0.0, %v573
        %575 = vmatmul.bf16.gmra.mxu0 %v511
        %v576 = vpop.f32.mrf.mxu0
        %v577 = vadd.f32 0.0, %v576
        %v578 = vpop.f32.mrf.mxu0
        %v579 = vadd.f32 0.0, %v578
        %580 = vdwg.mxu0
        %v585 = vunpack.c.l.b16 %v494
        %v586 = vunpack.c.l.b16 %v495
        %v587 = vunpack.c.l.b16 %v496
        %v588 = vunpack.c.l.b16 %v497
        %v589 = vpack.c.b16 %v586, %v585
        %v590 = vpack.c.b16 %v588, %v587
        %v609 = vunpack.c.l.b16 %v474
        %v610 = vunpack.c.l.b16 %v475
        %v611 = vunpack.c.l.b16 %v476
        %v612 = vunpack.c.l.b16 %v477
        %v613 = vunpack.c.l.b16 %v478
        %v614 = vunpack.c.l.b16 %v479
        %v615 = vunpack.c.l.b16 %v480
        %v616 = vunpack.c.l.b16 %v481
        %v617 = vunpack.c.l.b16 %v482
        %v618 = vunpack.c.l.b16 %v483
        %v619 = vunpack.c.l.b16 %v484
        %v620 = vunpack.c.l.b16 %v485
        %v621 = vunpack.c.l.b16 %v486
        %v622 = vunpack.c.l.b16 %v487
        %v623 = vunpack.c.l.b16 %v488
        %v624 = vunpack.c.l.b16 %v489
        %v625 = vpack.c.b16 %v610, %v609
        %v626 = vpack.c.b16 %v612, %v611
        %v627 = vpack.c.b16 %v614, %v613
        %v628 = vpack.c.b16 %v616, %v615
        %v629 = vpack.c.b16 %v618, %v617
        %v630 = vpack.c.b16 %v620, %v619
        %v631 = vpack.c.b16 %v622, %v621
        %v632 = vpack.c.b16 %v624, %v623
        %641 = vmatpush.bf16.msra.mxu0 %v632
        %642 = vmatpush.bf16.msra.mxu0 %v631
        %643 = vmatpush.bf16.msra.mxu0 %v630
        %644 = vmatpush.bf16.msra.mxu0 %v629
        %645 = vmatpush.bf16.msra.mxu0 %v628
        %646 = vmatpush.bf16.msra.mxu0 %v627
        %647 = vmatpush.bf16.msra.mxu0 %v626
        %648 = vmatpush.bf16.msra.mxu0 %v625
        %649 = vmatmul.bf16.gmra.mxu0 %v589
        %v650 = vpop.f32.mrf.mxu0
        %v651 = vadd.f32 0.0, %v650
        %v652 = vpop.f32.mrf.mxu0
        %v653 = vadd.f32 0.0, %v652
        %654 = vmatmul.bf16.gmra.mxu0 %v590
        %v655 = vpop.f32.mrf.mxu0
        %v656 = vadd.f32 0.0, %v655
        %v657 = vpop.f32.mrf.mxu0
        %v658 = vadd.f32 0.0, %v657
        %659 = vdwg.mxu0
        %v660 = vpack.c.bf16 %v574, %v572
        %v661 = vpack.c.bf16 %v579, %v577
        %v662 = vpack.c.bf16 %v653, %v651
        %v663 = vpack.c.bf16 %v658, %v656
        %v668 = vunpack.c.l.b16 %v498
        %v669 = vunpack.c.l.b16 %v499
        %v670 = vunpack.c.l.b16 %v500
        %v671 = vunpack.c.l.b16 %v501
        %v672 = vpack.c.b16 %v669, %v668
        %v673 = vpack.c.b16 %v671, %v670
        %vm676 = vcmask 261120
        %v678 = vsel %vm676, %v660, 0
        %v681 = vsel %vm676, %v661, 0
        %v684 = vsel %vm676, %v662, 0
        %v687 = vsel %vm676, %v663, 0
        %689 = vmatpush.bf16.msra.mxu0 0
        %690 = vmatpush.bf16.msra.mxu0 0
        %691 = vmatpush.bf16.msra.mxu0 0
        %692 = vmatpush.bf16.msra.mxu0 0
        %693 = vmatpush.bf16.msra.mxu0 0
        %694 = vmatpush.bf16.msra.mxu0 0
        %695 = vmatpush.bf16.msra.mxu0 %v673
        %696 = vmatpush.bf16.msra.mxu0 %v672
        %697 = vmatmul.bf16.gmra.mxu0 %v678
        %v698 = vpop.f32.mrf.mxu0
        %v699 = vadd.f32 0.0, %v698
        %v700 = vpop.f32.mrf.mxu0
        %v701 = vadd.f32 0.0, %v700
        %702 = vmatmul.bf16.gmra.mxu0 %v681
        %v703 = vpop.f32.mrf.mxu0
        %v704 = vadd.f32 0.0, %v703
        %v705 = vpop.f32.mrf.mxu0
        %v706 = vadd.f32 0.0, %v705
        %707 = vmatmul.bf16.gmra.mxu0 %v684
        %v708 = vpop.f32.mrf.mxu0
        %v709 = vadd.f32 0.0, %v708
        %v710 = vpop.f32.mrf.mxu0
        %v711 = vadd.f32 0.0, %v710
        %712 = vmatmul.bf16.gmra.mxu0 %v687
        %v713 = vpop.f32.mrf.mxu0
        %v714 = vadd.f32 0.0, %v713
        %v715 = vpop.f32.mrf.mxu0
        %v716 = vadd.f32 0.0, %v715
        %717 = vdwg.mxu0
        %v718 = vsel %vm676, %v699, 0.0
        %v719 = vsel %vm676, %v709, 0.0
        %v720 = vadd.f32 %v718, %v719
        %721 = vadd.xlane.f32.xlu0 %v720
        %v722 = vpop.xlane.xlu0 %721
        %v723 = vsel %vm676, %v701, 0.0
        %v724 = vsel %vm676, %v711, 0.0
        %v725 = vadd.f32 %v723, %v724
        %726 = vadd.xlane.f32.xlu0 %v725
        %v727 = vpop.xlane.xlu0 %726
        %v728 = vsel %vm676, %v704, 0.0
        %v729 = vsel %vm676, %v714, 0.0
        %v730 = vadd.f32 %v728, %v729
        %731 = vadd.xlane.f32.xlu0 %v730
        %v732 = vpop.xlane.xlu0 %731
        %v733 = vsel %vm676, %v706, 0.0
        %v734 = vsel %vm676, %v716, 0.0
        %v735 = vadd.f32 %v733, %v734
        %736 = vadd.xlane.f32.xlu0 %v735
        %v737 = vpop.xlane.xlu0 %736
        %v738 = vmul.f32 %v699, %v699
        %v739 = vmul.f32 %v701, %v701
        %v740 = vmul.f32 %v704, %v704
        %v741 = vmul.f32 %v706, %v706
        %v742 = vmul.f32 %v709, %v709
        %v743 = vmul.f32 %v711, %v711
        %v744 = vmul.f32 %v714, %v714
        %v745 = vmul.f32 %v716, %v716
        %v746 = vsel %vm676, %v738, 0.0
        %v747 = vsel %vm676, %v742, 0.0
        %v748 = vadd.f32 %v746, %v747
        %749 = vadd.xlane.f32.xlu0 %v748
        %v750 = vpop.xlane.xlu0 %749
        %v751 = vsel %vm676, %v739, 0.0
        %v752 = vsel %vm676, %v743, 0.0
        %v753 = vadd.f32 %v751, %v752
        %754 = vadd.xlane.f32.xlu0 %v753
        %v755 = vpop.xlane.xlu0 %754
        %v756 = vsel %vm676, %v740, 0.0
        %v757 = vsel %vm676, %v744, 0.0
        %v758 = vadd.f32 %v756, %v757
        %759 = vadd.xlane.f32.xlu0 %v758
        %v760 = vpop.xlane.xlu0 %759
        %v761 = vsel %vm676, %v741, 0.0
        %v762 = vsel %vm676, %v745, 0.0
        %v763 = vadd.f32 %v761, %v762
        %764 = vadd.xlane.f32.xlu0 %v763
        %v765 = vpop.xlane.xlu0 %764
        %v766 = vrcp.pop 64.0
        %v767 = vmul.f32 64.0, %v766
        %v768 = vsub.f32 1.0, %v767
        %v769 = vmul.f32 %v766, %v768
        %v770 = vadd.f32 %v766, %v769
        %vm771 = vweird.f32 %v766
        %v772 = vsel %vm771, %v766, %v770
        %v773 = vmul.f32 %v722, %v772
        %v774 = vmul.f32 %v727, %v772
        %v775 = vmul.f32 %v732, %v772
        %v776 = vmul.f32 %v737, %v772
        %v777 = vmul.f32 %v750, %v772
        %v778 = vmul.f32 %v755, %v772
        %v779 = vmul.f32 %v760, %v772
        %v780 = vmul.f32 %v765, %v772
        %v781 = vmul.f32 %v773, %v773
        %v782 = vmul.f32 %v774, %v774
        %v783 = vmul.f32 %v775, %v775
        %v784 = vmul.f32 %v776, %v776
        %v785 = vsub.f32 %v777, %v781
        %v786 = vsub.f32 %v778, %v782
        %v787 = vsub.f32 %v779, %v783
        %v788 = vsub.f32 %v780, %v784
        %v789 = vadd.f32 %v785, 1e-05
        %v790 = vadd.f32 %v786, 1e-05
        %v791 = vadd.f32 %v787, 1e-05
        %v792 = vadd.f32 %v788, 1e-05
        %v793 = vrsqrt.pop %v789
        %v794 = vmul.f32 %v793, %v789
        %v795 = vmul.f32 %v794, %v793
        %v796 = vmul.f32 0.5, %v795
        %v797 = vsub.f32 1.5, %v796
        %v798 = vmul.f32 %v793, %v797
        %vm799 = vweird.f32 %v789
        %vm800 = vweird.f32 %v793
        %vm801 = vmor %vm799, %vm800
        %v802 = vsel %vm801, %v793, %v798
        %v803 = vrsqrt.pop %v790
        %v804 = vmul.f32 %v803, %v790
        %v805 = vmul.f32 %v804, %v803
        %v806 = vmul.f32 0.5, %v805
        %v807 = vsub.f32 1.5, %v806
        %v808 = vmul.f32 %v803, %v807
        %vm809 = vweird.f32 %v790
        %vm810 = vweird.f32 %v803
        %vm811 = vmor %vm809, %vm810
        %v812 = vsel %vm811, %v803, %v808
        %v813 = vrsqrt.pop %v791
        %v814 = vmul.f32 %v813, %v791
        %v815 = vmul.f32 %v814, %v813
        %v816 = vmul.f32 0.5, %v815
        %v817 = vsub.f32 1.5, %v816
        %v818 = vmul.f32 %v813, %v817
        %vm819 = vweird.f32 %v791
        %vm820 = vweird.f32 %v813
        %vm821 = vmor %vm819, %vm820
        %v822 = vsel %vm821, %v813, %v818
        %v823 = vrsqrt.pop %v792
        %v824 = vmul.f32 %v823, %v792
        %v825 = vmul.f32 %v824, %v823
        %v826 = vmul.f32 0.5, %v825
        %v827 = vsub.f32 1.5, %v826
        %v828 = vmul.f32 %v823, %v827
        %vm829 = vweird.f32 %v792
        %vm830 = vweird.f32 %v823
        %vm831 = vmor %vm829, %vm830
        %v832 = vsel %vm831, %v823, %v828
        %v833 = vld [vmem:[%s448] sm:$0xff]
        %v834 = vld [vmem:[%s448 + $0x8] sm:$0xff]
        %v835 = vld [vmem:[%s448 + $0x10] sm:$0xff]
        %v836 = vld [vmem:[%s448 + $0x18] sm:$0xff]
        %v837 = vld [vmem:[%s454] sm:$0xff]
        %v838 = vld [vmem:[%s454 + $0x8] sm:$0xff]
        %v839 = vld [vmem:[%s454 + $0x10] sm:$0xff]
        %v840 = vld [vmem:[%s454 + $0x18] sm:$0xff]
        %v841 = vsub.f32 %v699, %v773
        %v842 = vsub.f32 %v701, %v774
        %v843 = vsub.f32 %v704, %v775
        %v844 = vsub.f32 %v706, %v776
        %v845 = vsub.f32 %v709, %v773
        %v846 = vsub.f32 %v711, %v774
        %v847 = vsub.f32 %v714, %v775
        %v848 = vsub.f32 %v716, %v776
        %v849 = vmul.f32 %v841, %v802
        %v850 = vmul.f32 %v842, %v812
        %v851 = vmul.f32 %v843, %v822
        %v852 = vmul.f32 %v844, %v832
        %v853 = vmul.f32 %v845, %v802
        %v854 = vmul.f32 %v846, %v812
        %v855 = vmul.f32 %v847, %v822
        %v856 = vmul.f32 %v848, %v832
        %858 = vset.pattern.permute.xlu0 0
        %859 = vperm.xlu0 %858, %v833
        %v860 = vpop.permute.xlu0 %859
        %863 = vset.pattern.permute.xlu0 0
        %864 = vperm.xlu0 %863, %v834
        %v865 = vpop.permute.xlu0 %864
        %868 = vset.pattern.permute.xlu0 0
        %869 = vperm.xlu0 %868, %v835
        %v870 = vpop.permute.xlu0 %869
        %873 = vset.pattern.permute.xlu0 0
        %874 = vperm.xlu0 %873, %v836
        %v875 = vpop.permute.xlu0 %874
        %v877 = vmul.f32 %v849, %v860
        %v878 = vmul.f32 %v850, %v865
        %v879 = vmul.f32 %v851, %v870
        %v880 = vmul.f32 %v852, %v875
        %v881 = vmul.f32 %v853, %v860
        %v882 = vmul.f32 %v854, %v865
        %v883 = vmul.f32 %v855, %v870
        %v884 = vmul.f32 %v856, %v875
        %886 = vset.pattern.permute.xlu0 0
        %887 = vperm.xlu0 %886, %v837
        %v888 = vpop.permute.xlu0 %887
        %891 = vset.pattern.permute.xlu0 0
        %892 = vperm.xlu0 %891, %v838
        %v893 = vpop.permute.xlu0 %892
        %896 = vset.pattern.permute.xlu0 0
        %897 = vperm.xlu0 %896, %v839
        %v898 = vpop.permute.xlu0 %897
        %901 = vset.pattern.permute.xlu0 0
        %902 = vperm.xlu0 %901, %v840
        %v903 = vpop.permute.xlu0 %902
        %v905 = vadd.f32 %v877, %v888
        %v906 = vadd.f32 %v878, %v893
        %v907 = vadd.f32 %v879, %v898
        %v908 = vadd.f32 %v880, %v903
        %v909 = vadd.f32 %v881, %v888
        %v910 = vadd.f32 %v882, %v893
        %v911 = vadd.f32 %v883, %v898
        %v912 = vadd.f32 %v884, %v903
        %v913 = vld [vmem:[%s402] sm:$0xf]
        %v914 = vld [vmem:[%s402 + $0x4] sm:$0xf]
        %v915 = vld [vmem:[%s402 + $0x8] sm:$0xf]
        %v916 = vld [vmem:[%s402 + $0xc] sm:$0xf]
        %v917 = vld [vmem:[%s402 + $0x10] sm:$0xf]
        %v918 = vld [vmem:[%s402 + $0x14] sm:$0xf]
        %v919 = vld [vmem:[%s402 + $0x18] sm:$0xf]
        %v920 = vld [vmem:[%s402 + $0x1c] sm:$0xf]
        %v921 = vunpack.c.l.bf16 %v913
        %v922 = vunpack.c.l.bf16 %v914
        %v923 = vunpack.c.l.bf16 %v915
        %v924 = vunpack.c.l.bf16 %v916
        %v925 = vunpack.c.l.bf16 %v917
        %v926 = vunpack.c.l.bf16 %v918
        %v927 = vunpack.c.l.bf16 %v919
        %v928 = vunpack.c.l.bf16 %v920
        %v929 = vadd.f32 %v921, %v905
        %v930 = vadd.f32 %v922, %v906
        %v931 = vadd.f32 %v923, %v907
        %v932 = vadd.f32 %v924, %v908
        %v933 = vadd.f32 %v925, %v909
        %v934 = vadd.f32 %v926, %v910
        %v935 = vadd.f32 %v927, %v911
        %v936 = vadd.f32 %v928, %v912
        %vm937 = vcmp.gt.f32.partialorder %v929, 20.0
        %vm938 = vcmp.gt.f32.partialorder %v930, 20.0
        %vm939 = vcmp.gt.f32.partialorder %v931, 20.0
        %vm940 = vcmp.gt.f32.partialorder %v932, 20.0
        %vm941 = vcmp.gt.f32.partialorder %v933, 20.0
        %vm942 = vcmp.gt.f32.partialorder %v934, 20.0
        %vm943 = vcmp.gt.f32.partialorder %v935, 20.0
        %vm944 = vcmp.gt.f32.partialorder %v936, 20.0
        %v945 = vmin.f32 %v929, 20.0
        %v946 = vmin.f32 %v930, 20.0
        %v947 = vmin.f32 %v931, 20.0
        %v948 = vmin.f32 %v932, 20.0
        %v949 = vmin.f32 %v933, 20.0
        %v950 = vmin.f32 %v934, 20.0
        %v951 = vmin.f32 %v935, 20.0
        %v952 = vmin.f32 %v936, 20.0
        %v953 = vmul.f32 %v945, 1.442695
        %v954 = vpow.pop %v953
        %v955 = vmul.f32 %v946, 1.442695
        %v956 = vpow.pop %v955
        %v957 = vmul.f32 %v947, 1.442695
        %v958 = vpow.pop %v957
        %v959 = vmul.f32 %v948, 1.442695
        %v960 = vpow.pop %v959
        %v961 = vmul.f32 %v949, 1.442695
        %v962 = vpow.pop %v961
        %v963 = vmul.f32 %v950, 1.442695
        %v964 = vpow.pop %v963
        %v965 = vmul.f32 %v951, 1.442695
        %v966 = vpow.pop %v965
        %v967 = vmul.f32 %v952, 1.442695
        %v968 = vpow.pop %v967
        %v969 = vadd.f32 %v954, 1.0
        %v970 = vlog2.pop %v969
        %v971 = vmul.f32 %v970, 0.6931472
        %v972 = vmul.f32 -0.5, %v954
        %v973 = vadd.f32 %v972, 1.0
        %v974 = vmul.f32 %v973, %v954
        %v975 = vand.u32 2147483647, %v954
        %vm976 = vcmp.lt.f32.partialorder %v975, 0.0004427343
        %v977 = vsel %vm976, %v974, %v971
        %v978 = vadd.f32 %v956, 1.0
        %v979 = vlog2.pop %v978
        %v980 = vmul.f32 %v979, 0.6931472
        %v981 = vmul.f32 -0.5, %v956
        %v982 = vadd.f32 %v981, 1.0
        %v983 = vmul.f32 %v982, %v956
        %v984 = vand.u32 2147483647, %v956
        %vm985 = vcmp.lt.f32.partialorder %v984, 0.0004427343
        %v986 = vsel %vm985, %v983, %v980
        %v987 = vadd.f32 %v958, 1.0
        %v988 = vlog2.pop %v987
        %v989 = vmul.f32 %v988, 0.6931472
        %v990 = vmul.f32 -0.5, %v958
        %v991 = vadd.f32 %v990, 1.0
        %v992 = vmul.f32 %v991, %v958
        %v993 = vand.u32 2147483647, %v958
        %vm994 = vcmp.lt.f32.partialorder %v993, 0.0004427343
        %v995 = vsel %vm994, %v992, %v989
        %v996 = vadd.f32 %v960, 1.0
        %v997 = vlog2.pop %v996
        %v998 = vmul.f32 %v997, 0.6931472
        %v999 = vmul.f32 -0.5, %v960
        %v1000 = vadd.f32 %v999, 1.0
        %v1001 = vmul.f32 %v1000, %v960
        %v1002 = vand.u32 2147483647, %v960
        %vm1003 = vcmp.lt.f32.partialorder %v1002, 0.0004427343
        %v1004 = vsel %vm1003, %v1001, %v998
        %v1005 = vadd.f32 %v962, 1.0
        %v1006 = vlog2.pop %v1005
        %v1007 = vmul.f32 %v1006, 0.6931472
        %v1008 = vmul.f32 -0.5, %v962
        %v1009 = vadd.f32 %v1008, 1.0
        %v1010 = vmul.f32 %v1009, %v962
        %v1011 = vand.u32 2147483647, %v962
        %vm1012 = vcmp.lt.f32.partialorder %v1011, 0.0004427343
        %v1013 = vsel %vm1012, %v1010, %v1007
        %v1014 = vadd.f32 %v964, 1.0
        %v1015 = vlog2.pop %v1014
        %v1016 = vmul.f32 %v1015, 0.6931472
        %v1017 = vmul.f32 -0.5, %v964
        %v1018 = vadd.f32 %v1017, 1.0
        %v1019 = vmul.f32 %v1018, %v964
        %v1020 = vand.u32 2147483647, %v964
        %vm1021 = vcmp.lt.f32.partialorder %v1020, 0.0004427343
        %v1022 = vsel %vm1021, %v1019, %v1016
        %v1023 = vadd.f32 %v966, 1.0
        %v1024 = vlog2.pop %v1023
        %v1025 = vmul.f32 %v1024, 0.6931472
        %v1026 = vmul.f32 -0.5, %v966
        %v1027 = vadd.f32 %v1026, 1.0
        %v1028 = vmul.f32 %v1027, %v966
        %v1029 = vand.u32 2147483647, %v966
        %vm1030 = vcmp.lt.f32.partialorder %v1029, 0.0004427343
        %v1031 = vsel %vm1030, %v1028, %v1025
        %v1032 = vadd.f32 %v968, 1.0
        %v1033 = vlog2.pop %v1032
        %v1034 = vmul.f32 %v1033, 0.6931472
        %v1035 = vmul.f32 -0.5, %v968
        %v1036 = vadd.f32 %v1035, 1.0
        %v1037 = vmul.f32 %v1036, %v968
        %v1038 = vand.u32 2147483647, %v968
        %vm1039 = vcmp.lt.f32.partialorder %v1038, 0.0004427343
        %v1040 = vsel %vm1039, %v1037, %v1034
        %v1041 = vsel %vm937, %v929, %v977
        %v1042 = vsel %vm938, %v930, %v986
        %v1043 = vsel %vm939, %v931, %v995
        %v1044 = vsel %vm940, %v932, %v1004
        %v1045 = vsel %vm941, %v933, %v1013
        %v1046 = vsel %vm942, %v934, %v1022
        %v1047 = vsel %vm943, %v935, %v1031
        %v1048 = vsel %vm944, %v936, %v1040
        %v1049 = vpack.c.bf16 %v1041, %v1041
        %v1050 = vpack.c.bf16 %v1042, %v1042
        %v1051 = vpack.c.bf16 %v1043, %v1043
        %v1052 = vpack.c.bf16 %v1044, %v1044
        %v1053 = vpack.c.bf16 %v1045, %v1045
        %v1054 = vpack.c.bf16 %v1046, %v1046
        %v1055 = vpack.c.bf16 %v1047, %v1047
        %v1056 = vpack.c.bf16 %v1048, %v1048
        %vm1057 = vcmask 257024
        %1058 = vst.msk [vmem:[%s441] sm:$0xf] %vm1057, %v1049
        %1059 = vst.msk [vmem:[%s441 + $0x4] sm:$0xf] %vm1057, %v1050
        %1060 = vst.msk [vmem:[%s441 + $0x8] sm:$0xf] %vm1057, %v1051
        %1061 = vst.msk [vmem:[%s441 + $0xc] sm:$0xf] %vm1057, %v1052
        %1062 = vst.msk [vmem:[%s441 + $0x10] sm:$0xf] %vm1057, %v1053
        %1063 = vst.msk [vmem:[%s441 + $0x14] sm:$0xf] %vm1057, %v1054
        %1064 = vst.msk [vmem:[%s441 + $0x18] sm:$0xf] %vm1057, %v1055
        %1065 = vst.msk [vmem:[%s441 + $0x1c] sm:$0xf] %vm1057, %v1056
        %s1066 = sand.u32 %s171, 1
        %s1067 = sand.u32 %s171, 1
        %s1068 = smul.addr %s1067, 32
        %s1069 = scalar_lea.vmem [#allocation4], %s1068
        // Predicated region
        $region127: #{hgcn_layer.3} parent=117 // pred_check
          %p1070 = pneg %p181
        $region128: #{hgcn_layer.3} parent=117 // pred_check_branch
          %1072 = sbr.rel (%p1070) target = $region130
        $region129: #{hgcn_layer.3} parent=117 // pred_region
          %s1073 = smul.u32 4, %s17
          %s1074 = smul.addr %s1073, 4
          %s1075 = scalar_lea.vmem %s6, %s1074
          // Predicated region
          $region131: #{hgcn_layer.3} parent=129 // pred_check
            _
          $region132: #{hgcn_layer.3} parent=129 // pred_check_branch
            %1077 = sbr.rel (0) target = $region134
          $region133: #{hgcn_layer.3} parent=129 // pred_region
            // Predicated region
            $region135: #{hgcn_layer.3} parent=133 // pred_check
              _
            $region136: #{hgcn_layer.3} parent=133 // pred_check_branch
              %1079 = sbr.rel target = $region138
            $region137: #{hgcn_layer.3} parent=133 // pred_region
              // Predicated region
              $region150: #{hgcn_layer.3} parent=137 // pred_check
                _
              $region151: #{hgcn_layer.3} parent=137 // pred_check_branch
                %1109 = sbr.rel (0) target = $region153
              $region152: #{hgcn_layer.3} parent=137 // pred_region
                loop: start=0, step=1, limit=1
                $region154: #{hgcn_layer.3} parent=152 // loop_pre_header
                  _
                $region155: #{hgcn_layer.3} parent=152 // loop_header
                  %s1111 = sphi 0, %s1115
                  %p1112 = scmp.ge.s32.totalorder %s1111, 1
                  %s1116 = sphi %s1069, %s1069
                  %s1117 = sphi %s1075, %s1075
                $region156: #{hgcn_layer.3} parent=152 // loop_header_branch
                  %1114 = sbr.rel (%p1112) target = $region160
                $region157: #{hgcn_layer.3} parent=152 // loop_body
                  _
                $region158: #{hgcn_layer.3} parent=152 // loop_footer
                  %s1115 = sadd.s32 1, %s1111
                $region159: #{hgcn_layer.3} parent=152 // loop_footer_branch
                  %1110 = sbr.rel target = $region155
                $region160: #{hgcn_layer.3} parent=152 // loop_exit
                  _
                %s1119 = ssub.s32 16, 1
                loop: start=0, step=1, limit=1
                $region161: #{hgcn_layer.3} parent=152 // loop_pre_header
                  _
                $region162: #{hgcn_layer.3} parent=152 // loop_header
                  %s1121 = sphi 0, %s1125
                  %p1122 = scmp.ge.s32.totalorder %s1121, 1
                  %s1126 = sphi %s1069, %s1069
                  %s1127 = sphi %s1075, %s1075
                $region163: #{hgcn_layer.3} parent=152 // loop_header_branch
                  %1124 = sbr.rel (%p1122) target = $region167
                $region164: #{hgcn_layer.3} parent=152 // loop_body
                  %v1128 = vld [vmem:[%s1126] sm:%s1119]
                  %1129 = vst [vmem:[%s1127] sm:%s1119] %v1128
                  %v1130 = vld [vmem:[%s1126 + $0x4] sm:%s1119]
                  %1131 = vst [vmem:[%s1127 + $0x4] sm:%s1119] %v1130
                  %v1132 = vld [vmem:[%s1126 + $0x8] sm:%s1119]
                  %1133 = vst [vmem:[%s1127 + $0x8] sm:%s1119] %v1132
                  %v1134 = vld [vmem:[%s1126 + $0xc] sm:%s1119]
                  %1135 = vst [vmem:[%s1127 + $0xc] sm:%s1119] %v1134
                  %v1136 = vld [vmem:[%s1126 + $0x10] sm:%s1119]
                  %1137 = vst [vmem:[%s1127 + $0x40] sm:%s1119] %v1136
                  %v1138 = vld [vmem:[%s1126 + $0x14] sm:%s1119]
                  %1139 = vst [vmem:[%s1127 + $0x44] sm:%s1119] %v1138
                  %v1140 = vld [vmem:[%s1126 + $0x18] sm:%s1119]
                  %1141 = vst [vmem:[%s1127 + $0x48] sm:%s1119] %v1140
                  %v1142 = vld [vmem:[%s1126 + $0x1c] sm:%s1119]
                  %1143 = vst [vmem:[%s1127 + $0x4c] sm:%s1119] %v1142
                $region165: #{hgcn_layer.3} parent=152 // loop_footer
                  %s1125 = sadd.s32 1, %s1121
                $region166: #{hgcn_layer.3} parent=152 // loop_footer_branch
                  %1120 = sbr.rel target = $region162
                $region167: #{hgcn_layer.3} parent=152 // loop_exit
                  _
              $region153: #{hgcn_layer.3} parent=137 // pred_fallthru
                _
            $region138: #{hgcn_layer.3} parent=133 // pred_fallthru
              _
            // Predicated region
            $region139: #{hgcn_layer.3} parent=133 // pred_check
              _
            $region140: #{hgcn_layer.3} parent=133 // pred_check_branch
              %1081 = sbr.rel (0) target = $region142
            $region141: #{hgcn_layer.3} parent=133 // pred_region
              %s1083 = ssub.s32 16, 1
              loop: start=0, step=1, limit=1
              $region143: #{hgcn_layer.3} parent=141 // loop_pre_header
                _
              $region144: #{hgcn_layer.3} parent=141 // loop_header
                %s1085 = sphi 0, %s1089
                %p1086 = scmp.ge.s32.totalorder %s1085, 1
                %s1090 = sphi %s1069, %s1069
                %s1091 = sphi %s1075, %s1075
              $region145: #{hgcn_layer.3} parent=141 // loop_header_branch
                %1088 = sbr.rel (%p1086) target = $region149
              $region146: #{hgcn_layer.3} parent=141 // loop_body
                %v1092 = vld [vmem:[%s1090] sm:%s1083]
                %1093 = vst [vmem:[%s1091] sm:%s1083] %v1092
                %v1094 = vld [vmem:[%s1090 + $0x4] sm:%s1083]
                %1095 = vst [vmem:[%s1091 + $0x4] sm:%s1083] %v1094
                %v1096 = vld [vmem:[%s1090 + $0x8] sm:%s1083]
                %1097 = vst [vmem:[%s1091 + $0x8] sm:%s1083] %v1096
                %v1098 = vld [vmem:[%s1090 + $0xc] sm:%s1083]
                %1099 = vst [vmem:[%s1091 + $0xc] sm:%s1083] %v1098
                %v1100 = vld [vmem:[%s1090 + $0x10] sm:%s1083]
                %1101 = vst [vmem:[%s1091 + $0x40] sm:%s1083] %v1100
                %v1102 = vld [vmem:[%s1090 + $0x14] sm:%s1083]
                %1103 = vst [vmem:[%s1091 + $0x44] sm:%s1083] %v1102
                %v1104 = vld [vmem:[%s1090 + $0x18] sm:%s1083]
                %1105 = vst [vmem:[%s1091 + $0x48] sm:%s1083] %v1104
                %v1106 = vld [vmem:[%s1090 + $0x1c] sm:%s1083]
                %1107 = vst [vmem:[%s1091 + $0x4c] sm:%s1083] %v1106
              $region147: #{hgcn_layer.3} parent=141 // loop_footer
                %s1089 = sadd.s32 1, %s1085
              $region148: #{hgcn_layer.3} parent=141 // loop_footer_branch
                %1084 = sbr.rel target = $region144
              $region149: #{hgcn_layer.3} parent=141 // loop_exit
                _
            $region142: #{hgcn_layer.3} parent=133 // pred_fallthru
              _
          $region134: #{hgcn_layer.3} parent=129 // pred_fallthru
            _
          %1144 = vnop
        $region130: #{hgcn_layer.3} parent=117 // pred_fallthru
          _
      $region118: #{hgcn_layer.3} parent=5 // pred_fallthru
        _
      %p1145 = scmp.le.s32.totalorder 2, %s12
      // Predicated region
      $region168: #{hgcn_layer.3} parent=5 // pred_check
        %p1146 = pneg %p1145
      $region169: #{hgcn_layer.3} parent=5 // pred_check_branch
        %1148 = sbr.rel (%p1146) target = $region171
      $region170: #{hgcn_layer.3} parent=5 // pred_region
        %s1149 = ssub.s32 %s12, 2
        // Predicated region
        $region172: #{hgcn_layer.3} parent=170 // pred_check
          %p1150 = pneg %p187
        $region173: #{hgcn_layer.3} parent=170 // pred_check_branch
          %1152 = sbr.rel (%p1150) target = $region175
        $region174: #{hgcn_layer.3} parent=170 // pred_region
          %s1153 = sand.u32 %s172, 1
          %s1154 = sand.u32 %s172, 1
          %s1155 = smul.addr %s1154, 32
          %s1156 = scalar_lea.vmem [#allocation4], %s1155
        $region175: #{hgcn_layer.3} parent=170 // pred_fallthru
          _
      $region171: #{hgcn_layer.3} parent=5 // pred_fallthru
        _
    $region6: #{hgcn_layer.3} parent=1 // loop_footer
      %s16 = sadd.s32 1, %s12
    $region7: #{hgcn_layer.3} parent=1 // loop_footer_branch
      %11 = sbr.rel target = $region3
    $region8: #{hgcn_layer.3} parent=1 // loop_exit
      _

</llo_original>
